<compile_context>
chip_gen: v6e
topology: v6e:2x2x1
jax: 0.10.0
libtpu: 0.0.40
codegen_flags: <defaults>
</compile_context>

<pallas_src>
import functools

import jax
import jax.numpy as jnp
from jax import lax
from jax.experimental import pallas as pl
from jax.experimental.pallas import tpu as pltpu

# Explicit scoped-VMEM budget (defaults are 16 MiB on v5e, 32 MiB on v6e/v7x).
_VMEM_LIMIT = 64 * 1024 * 1024


def _heads_per_block(n_head, head_size):
    """Pack heads so the lane (last) dim of each attention block is a multiple
    of 128, or the full d_model — keeps DMAs and output stores lane-dense."""
    for g in range(1, n_head):
        if n_head % g == 0 and (g * head_size) % 128 == 0:
            return g
    return n_head  # block covers all heads -> last dim == d_model (always legal)


# ---------------------------------------------------------------------------
# Tiled linear: y = x @ W + b   (bf16 MXU feeds, fp32 accumulation)
# ---------------------------------------------------------------------------
def _linear_kernel(x_ref, w_ref, b_ref, o_ref):
    x = x_ref[...].astype(jnp.bfloat16)          # no-op when x is already bf16
    acc = jnp.dot(x, w_ref[...], preferred_element_type=jnp.float32)
    o_ref[...] = (acc + b_ref[...]).astype(o_ref.dtype)


def _linear(x, w_bf16, b, *, out_dtype, tile_m=512, tile_n=512):
    """x: (M, Din), w_bf16: (Din, Dout) bf16, b: (1, Dout) f32 -> (M, Dout)."""
    M, Din = x.shape
    Dout = w_bf16.shape[1]
    tm = min(tile_m, M)
    tn = min(tile_n, Dout)
    grid = (pl.cdiv(M, tm), pl.cdiv(Dout, tn))
    return pl.pallas_call(
        _linear_kernel,
        out_shape=jax.ShapeDtypeStruct((M, Dout), out_dtype),
        grid_spec=pltpu.PrefetchScalarGridSpec(
            num_scalar_prefetch=0,
            grid=grid,
            in_specs=[
                pl.BlockSpec((tm, Din), lambda i, j: (i, 0)),
                pl.BlockSpec((Din, tn), lambda i, j: (0, j)),   # weight tiled on Dout
                pl.BlockSpec((1, tn), lambda i, j: (0, j)),
            ],
            out_specs=pl.BlockSpec((tm, tn), lambda i, j: (i, j)),
        ),
        compiler_params=pltpu.CompilerParams(
            dimension_semantics=("parallel", "parallel"),
            vmem_limit_bytes=_VMEM_LIMIT),
    )(x, w_bf16, b)


# ---------------------------------------------------------------------------
# Fused QKV projection (self-attention): read x once, emit Q, K, V in bf16
# ---------------------------------------------------------------------------
def _qkv_fused_kernel(x_ref, w_ref, b_ref, q_ref, k_ref, v_ref):
    D = q_ref.shape[-1]
    x = x_ref[...].astype(jnp.bfloat16)
    acc = jnp.dot(x, w_ref[...], preferred_element_type=jnp.float32) + b_ref[...]
    q_ref[...] = acc[:, :D].astype(q_ref.dtype)
    k_ref[...] = acc[:, D:2 * D].astype(k_ref.dtype)
    v_ref[...] = acc[:, 2 * D:].astype(v_ref.dtype)


def _qkv_projection(x2d, w_qkv, b_qkv, *, d_model, tile_m=512):
    M = x2d.shape[0]
    D = d_model
    tm = min(tile_m, M)
    grid = (pl.cdiv(M, tm),)
    outs = pl.pallas_call(
        _qkv_fused_kernel,
        out_shape=[jax.ShapeDtypeStruct((M, D), jnp.bfloat16)] * 3,
        grid_spec=pltpu.PrefetchScalarGridSpec(
            num_scalar_prefetch=0,
            grid=grid,
            in_specs=[
                pl.BlockSpec((tm, D), lambda i: (i, 0)),
                pl.BlockSpec((D, 3 * D), lambda i: (0, 0)),   # fused weight resident
                pl.BlockSpec((1, 3 * D), lambda i: (0, 0)),
            ],
            out_specs=[pl.BlockSpec((tm, D), lambda i: (i, 0))] * 3,
        ),
        compiler_params=pltpu.CompilerParams(
            dimension_semantics=("parallel",),
            vmem_limit_bytes=_VMEM_LIMIT),
    )(x2d, w_qkv, b_qkv)
    return outs[0], outs[1], outs[2]


# ---------------------------------------------------------------------------
# Flash attention straight over the (B, S, D) layout (heads via index_map)
# ---------------------------------------------------------------------------
def _flash_attn_kernel(q_ref, k_ref, v_ref, o_ref, m_sc, l_sc, acc_sc,
                       *, scale, heads_per_block, head_size,
                       kv_seq_len, block_k, mask_kv):
    kv_idx = pl.program_id(3)

    @pl.when(kv_idx == 0)
    def _():
        m_sc[...] = jnp.full(m_sc.shape, -jnp.inf, m_sc.dtype)
        l_sc[...] = jnp.zeros(l_sc.shape, l_sc.dtype)
        acc_sc[...] = jnp.zeros(acc_sc.shape, acc_sc.dtype)

    # Softmax scale applied to q once per q tile (not per kv step).
    q = q_ref[0] * scale                     # (tq, G*hs) bf16
    k = k_ref[0]                             # (tk, G*hs) bf16
    v = v_ref[0]                             # (tk, G*hs) bf16

    if mask_kv:  # only emitted when Skv % tk != 0 (mask padded kv columns)
        col = kv_idx * block_k + lax.broadcasted_iota(
            jnp.int32, (q.shape[0], k.shape[0]), 1)
        kv_valid = col < kv_seq_len

    hs = head_size
    for g in range(heads_per_block):         # static; G == 1 when hs >= 128
        sl = slice(g * hs, (g + 1) * hs)
        # s = q_g @ k_g^T, fp32 accumulation, no explicit transpose.
        s = lax.dot_general(q[:, sl], k[:, sl], (((1,), (1,)), ((), ())),
                            preferred_element_type=jnp.float32)   # (tq, tk)
        if mask_kv:
            s = jnp.where(kv_valid, s, -jnp.inf)
        m_prev = m_sc[g]
        m_new = jnp.maximum(m_prev, jnp.max(s, axis=-1, keepdims=True))
        alpha = jnp.exp(m_prev - m_new)
        p = jnp.exp(s - m_new)
        l_sc[g] = alpha * l_sc[g] + jnp.sum(p, axis=-1, keepdims=True)
        acc_sc[g] = alpha * acc_sc[g] + jnp.dot(
            p.astype(jnp.bfloat16), v[:, sl], preferred_element_type=jnp.float32)
        m_sc[g] = m_new

    @pl.when(kv_idx == pl.num_programs(3) - 1)
    def _():
        for g in range(heads_per_block):
            inv_l = pl.reciprocal(l_sc[g], approx=True)     # EUP vrcp, ~free
            o_ref[0, :, g * hs:(g + 1) * hs] = (acc_sc[g] * inv_l).astype(o_ref.dtype)


def _flash_attention(q, k, v, *, n_head, head_size, block_q=512, block_k=256):
    """q: (B, Sq, D) bf16, k/v: (B, Skv, D) bf16 -> (B, Sq, D) bf16.
    block_k=256 fills the 256-wide MXU on v6e/v7x; use 128 on v5e."""
    B, Sq, D = q.shape
    Skv = k.shape[1]
    hs = head_size
    G = _heads_per_block(n_head, hs)
    n_groups = n_head // G
    lane = G * hs

    tq = min(block_q, Sq)
    tk = min(block_k, Skv)
    grid = (B, n_groups, pl.cdiv(Sq, tq), pl.cdiv(Skv, tk))

    kernel = functools.partial(
        _flash_attn_kernel,
        scale=1.0 / float(hs) ** 0.5,
        heads_per_block=G, head_size=hs,
        kv_seq_len=Skv, block_k=tk, mask_kv=(Skv % tk) != 0)

    q_spec = pl.BlockSpec((1, tq, lane), lambda b, g, qi, ki: (b, qi, g))
    kv_spec = pl.BlockSpec((1, tk, lane), lambda b, g, qi, ki: (b, ki, g))
    o_spec = pl.BlockSpec((1, tq, lane), lambda b, g, qi, ki: (b, qi, g))

    return pl.pallas_call(
        kernel,
        out_shape=jax.ShapeDtypeStruct((B, Sq, D), jnp.bfloat16),
        grid_spec=pltpu.PrefetchScalarGridSpec(
            num_scalar_prefetch=0,
            grid=grid,
            in_specs=[q_spec, kv_spec, kv_spec],
            out_specs=o_spec,
            scratch_shapes=[
                pltpu.VMEM((G, tq, 1), jnp.float32),    # running max m
                pltpu.VMEM((G, tq, 1), jnp.float32),    # running sum l
                pltpu.VMEM((G, tq, hs), jnp.float32),   # fp32 accumulator
            ],
        ),
        compiler_params=pltpu.CompilerParams(
            # batch / head-group / q-tile axes shard across TCs; kv axis is the
            # online-softmax reduction -> arbitrary and innermost.
            dimension_semantics=("parallel", "parallel", "parallel", "arbitrary"),
            vmem_limit_bytes=_VMEM_LIMIT),
    )(q, k, v)


# ---------------------------------------------------------------------------
# Full multi-head attention forward (general / cross-attention path)
# ---------------------------------------------------------------------------
def multi_head_attention(query, key, value, params, *, n_head,
                         block_q=512, block_k=256, tile_m=512, tile_n=512):
    """query: (B, Sq, D), key/value: (B, Skv, D), float32."""
    B, Sq, D = query.shape
    assert D % n_head == 0, "d_model must be divisible by n_head"
    hs = D // n_head

    def project(x, w, b):
        Bx, Sx, _ = x.shape
        y = _linear(x.reshape(Bx * Sx, D), w, b, out_dtype=jnp.bfloat16,
                    tile_m=tile_m, tile_n=tile_n)
        return y.reshape(Bx, Sx, D)          # free reshape; heads split by index_map

    Q = project(query, params["wq"], params["bq"])
    K = project(key, params["wk"], params["bk"])
    V = project(value, params["wv"], params["bv"])

    ctx = _flash_attention(Q, K, V, n_head=n_head, head_size=hs,
                           block_q=block_q, block_k=block_k)   # (B, Sq, D) bf16
    out = _linear(ctx.reshape(B * Sq, D), params["wo"], params["bo"],
                  out_dtype=query.dtype, tile_m=tile_m, tile_n=tile_n)
    return out.reshape(B, Sq, D)


def multi_head_self_attention(x, params, *, n_head,
                              block_q=512, block_k=256, tile_m=512, tile_n=512):
    """Self-attention fast path: the fused QKV kernel reads x from HBM once."""
    B, S, D = x.shape
    assert D % n_head == 0
    hs = D // n_head
    # Fused (D, 3D) weight is kept VMEM-resident; fall back for very large D.
    if 6 * D * D > (16 << 20):
        return multi_head_attention(x, x, x, params, n_head=n_head,
                                    block_q=block_q, block_k=block_k,
                                    tile_m=tile_m, tile_n=tile_n)
    q, k, v = _qkv_projection(x.reshape(B * S, D), params["w_qkv"],
                              params["b_qkv"], d_model=D, tile_m=tile_m)
    q = q.reshape(B, S, D)
    k = k.reshape(B, S, D)
    v = v.reshape(B, S, D)
    ctx = _flash_attention(q, k, v, n_head=n_head, head_size=hs,
                           block_q=block_q, block_k=block_k)
    out = _linear(ctx.reshape(B * S, D), params["wo"], params["bo"],
                  out_dtype=x.dtype, tile_m=tile_m, tile_n=tile_n)
    return out.reshape(B, S, D)


# ---------------------------------------------------------------------------
# Parameters (per-head nn.Linear weights concatenated, as in the PyTorch module)
# ---------------------------------------------------------------------------
def init_params(key, d_model, n_head):
    """f32 reference params: x @ W + b == torch.cat([head_h(x) for h], dim=-1)."""
    head_size = d_model // n_head
    bound = 1.0 / float(d_model) ** 0.5
    keys = jax.random.split(key, 8)

    def make_proj(kw, kb):
        w = jax.random.uniform(kw, (n_head, head_size, d_model),
                               jnp.float32, -bound, bound)
        b = jax.random.uniform(kb, (n_head, head_size),
                               jnp.float32, -bound, bound)
        w_big = jnp.concatenate([w[h].T for h in range(n_head)], axis=1)  # (D, D)
        b_big = b.reshape(1, d_model)                                     # (1, D)
        return w_big, b_big

    wq, bq = make_proj(keys[0], keys[1])
    wk, bk = make_proj(keys[2], keys[3])
    wv, bv = make_proj(keys[4], keys[5])
    wo = jax.random.uniform(keys[6], (d_model, d_model), jnp.float32, -bound, bound)
    bo = jax.random.uniform(keys[7], (1, d_model), jnp.float32, -bound, bound)
    return dict(wq=wq, bq=bq, wk=wk, bk=bk, wv=wv, bv=bv, wo=wo, bo=bo)


def prepare_params(params):
    """Kernel-ready params: weights pre-cast to bf16 ONCE (outside jit), biases
    f32, plus the fused (D, 3D) QKV weight for the self-attention path."""
    return dict(
        wq=params["wq"].astype(jnp.bfloat16), bq=params["bq"],
        wk=params["wk"].astype(jnp.bfloat16), bk=params["bk"],
        wv=params["wv"].astype(jnp.bfloat16), bv=params["bv"],
        wo=params["wo"].astype(jnp.bfloat16), bo=params["bo"],
        w_qkv=jnp.concatenate(
            [params["wq"], params["wk"], params["wv"]], axis=1).astype(jnp.bfloat16),
        b_qkv=jnp.concatenate([params["bq"], params["bk"], params["bv"]], axis=1),
    )


def reference_mha(query, key, value, params, *, n_head):
    """Pure-JAX fp32 reference mirroring the PyTorch forward (mask=False)."""
    B, Sq, D = query.shape
    hs = D // n_head
    Q = query @ params["wq"] + params["bq"][0]
    K = key @ params["wk"] + params["bk"][0]
    V = value @ params["wv"] + params["bv"][0]
    Q = Q.reshape(B, Sq, n_head, hs).transpose(0, 2, 1, 3)
    K = K.reshape(B, -1, n_head, hs).transpose(0, 2, 1, 3)
    V = V.reshape(B, -1, n_head, hs).transpose(0, 2, 1, 3)
    wei = jnp.einsum("bhqd,bhkd->bhqk", Q, K) / jnp.sqrt(float(hs))
    wei = jax.nn.softmax(wei, axis=-1)
    out = jnp.einsum("bhqk,bhkd->bhqd", wei, V)
    out = out.transpose(0, 2, 1, 3).reshape(B, Sq, D)
    return out @ params["wo"] + params["bo"][0]


if __name__ == "__main__":
    n_head, d_model = 4, 32
    batch, seq_len = 2, 8

    root = jax.random.PRNGKey(0)
    k_q, k_k, k_v, k_p = jax.random.split(root, 4)
    query = jax.random.normal(k_q, (batch, seq_len, d_model), jnp.float32)
    key = jax.random.normal(k_k, (batch, seq_len, d_model), jnp.float32)
    value = jax.random.normal(k_v, (batch, seq_len, d_model), jnp.float32)

    ref_params = init_params(k_p, d_model, n_head)
    kparams = prepare_params(ref_params)   # bf16 weights prepared once, not per call

    # General (cross-attention) path.
    mha = jax.jit(functools.partial(multi_head_attention, n_head=n_head))
    out = jax.block_until_ready(mha(query, key, value, kparams))
    ref = reference_mha(query, key, value, ref_params, n_head=n_head)
    assert out.shape == (batch, seq_len, d_model)
    # bf16 intermediates + approx reciprocal -> looser tolerance than pure fp32.
    assert jnp.allclose(out, ref, atol=5e-2, rtol=5e-2), "mismatch vs JAX reference"

    # Fused self-attention path (x read once for Q/K/V).
    self_mha = jax.jit(functools.partial(multi_head_self_attention, n_head=n_head))
    out_sa = jax.block_until_ready(self_mha(query, kparams))
    ref_sa = reference_mha(query, query, query, ref_params, n_head=n_head)
    assert jnp.allclose(out_sa, ref_sa, atol=5e-2, rtol=5e-2), "self-attn mismatch"

    print("KERNEL_OK")
</pallas_src>

<mosaic_0001>
module attributes {stable_mosaic.version = 11 : i64} {
  func.func @_linear_kernel(%arg0: i32, %arg1: i32, %arg2: memref<16x32xf32, #tpu.memory_space<vmem>>, %arg3: memref<32x32xbf16, #tpu.memory_space<vmem>>, %arg4: memref<1x32xf32, #tpu.memory_space<vmem>>, %arg5: memref<16x32xbf16, #tpu.memory_space<vmem>>) attributes {dimension_semantics = [#tpu.dimension_semantics<parallel>, #tpu.dimension_semantics<parallel>], iteration_bounds = array<i64: 1, 1>, scalar_prefetch = 0 : i64, scratch_operands = 0 : i64, tpu.core_type = #tpu.core_type<tc>, window_params = [{transform_indices = @transform_0, window_bounds = array<i64: 16, 32>}, {transform_indices = @transform_1, window_bounds = array<i64: 32, 32>}, {transform_indices = @transform_2, window_bounds = array<i64: 1, 32>}, {transform_indices = @transform_3, window_bounds = array<i64: 16, 32>}]} {
    %c0 = arith.constant 0 : index
    %c0_0 = arith.constant 0 : index
    %0 = vector.load %arg2[%c0, %c0_0] : memref<16x32xf32, #tpu.memory_space<vmem>>, vector<16x32xf32>
    %1 = arith.truncf %0 : vector<16x32xf32> to vector<16x32xbf16>
    %c0_1 = arith.constant 0 : index
    %c0_2 = arith.constant 0 : index
    %2 = vector.load %arg3[%c0_1, %c0_2] : memref<32x32xbf16, #tpu.memory_space<vmem>>, vector<32x32xbf16>
    %cst = arith.constant dense<0.000000e+00> : vector<16x32xf32>
    %3 = tpu.matmul %1, %2, %cst {dimension_numbers = #tpu.dot_dimension_numbers<[1], [0], [0], [1], [0, 0, 1, 1], [], []>} : vector<16x32xbf16>, vector<32x32xbf16>, vector<16x32xf32> -> vector<16x32xf32>
    %c0_3 = arith.constant 0 : index
    %c0_4 = arith.constant 0 : index
    %4 = vector.load %arg4[%c0_3, %c0_4] : memref<1x32xf32, #tpu.memory_space<vmem>>, vector<1x32xf32>
    %5 = vector.broadcast %4 : vector<1x32xf32> to vector<16x32xf32>
    %6 = arith.addf %3, %5 : vector<16x32xf32>
    %7 = arith.truncf %6 : vector<16x32xf32> to vector<16x32xbf16>
    %c0_5 = arith.constant 0 : index
    %c0_6 = arith.constant 0 : index
    %8 = vector.load %arg5[%c0_5, %c0_6] : memref<16x32xbf16, #tpu.memory_space<vmem>>, vector<16x32xbf16>
    tpu.vector_store %arg5[%c0_5, %c0_6], %7 {strides = array<i32>} : memref<16x32xbf16, #tpu.memory_space<vmem>>, vector<16x32xbf16>,
    return
  }
  func.func @transform_0(%arg0: i32, %arg1: i32) -> (i32, i32) {
    %c0_i32 = arith.constant 0 : i32
    %c0_i32_0 = arith.constant 0 : i32
    return %arg0, %c0_i32 : i32, i32
  }
  func.func @transform_1(%arg0: i32, %arg1: i32) -> (i32, i32) {
    %c0_i32 = arith.constant 0 : i32
    %c0_i32_0 = arith.constant 0 : i32
    return %c0_i32, %arg1 : i32, i32
  }
  func.func @transform_2(%arg0: i32, %arg1: i32) -> (i32, i32) {
    %c0_i32 = arith.constant 0 : i32
    %c0_i32_0 = arith.constant 0 : i32
    return %c0_i32, %arg1 : i32, i32
  }
  func.func @transform_3(%arg0: i32, %arg1: i32) -> (i32, i32) {
    %c0_i32 = arith.constant 0 : i32
    return %arg0, %arg1 : i32, i32
  }
}

module attributes {stable_mosaic.version = 11 : i64} {
  func.func @_linear_kernel(%arg0: i32, %arg1: i32, %arg2: memref<16x32xf32, #tpu.memory_space<vmem>>, %arg3: memref<32x32xbf16, #tpu.memory_space<vmem>>, %arg4: memref<1x32xf32, #tpu.memory_space<vmem>>, %arg5: memref<16x32xbf16, #tpu.memory_space<vmem>>) attributes {dimension_semantics = [#tpu.dimension_semantics<parallel>, #tpu.dimension_semantics<parallel>], iteration_bounds = array<i64: 1, 1>, scalar_prefetch = 0 : i64, scratch_operands = 0 : i64, tpu.core_type = #tpu.core_type<tc>, window_params = [{transform_indices = @transform_0, window_bounds = array<i64: 16, 32>}, {transform_indices = @transform_1, window_bounds = array<i64: 32, 32>}, {transform_indices = @transform_2, window_bounds = array<i64: 1, 32>}, {transform_indices = @transform_3, window_bounds = array<i64: 16, 32>}]} {
    %c0 = arith.constant 0 : index
    %c0_0 = arith.constant 0 : index
    %0 = vector.load %arg2[%c0, %c0_0] : memref<16x32xf32, #tpu.memory_space<vmem>>, vector<16x32xf32>
    %1 = arith.truncf %0 : vector<16x32xf32> to vector<16x32xbf16>
    %c0_1 = arith.constant 0 : index
    %c0_2 = arith.constant 0 : index
    %2 = vector.load %arg3[%c0_1, %c0_2] : memref<32x32xbf16, #tpu.memory_space<vmem>>, vector<32x32xbf16>
    %cst = arith.constant dense<0.000000e+00> : vector<16x32xf32>
    %3 = tpu.matmul %1, %2, %cst {dimension_numbers = #tpu.dot_dimension_numbers<[1], [0], [0], [1], [0, 0, 1, 1], [], []>} : vector<16x32xbf16>, vector<32x32xbf16>, vector<16x32xf32> -> vector<16x32xf32>
    %c0_3 = arith.constant 0 : index
    %c0_4 = arith.constant 0 : index
    %4 = vector.load %arg4[%c0_3, %c0_4] : memref<1x32xf32, #tpu.memory_space<vmem>>, vector<1x32xf32>
    %5 = vector.broadcast %4 : vector<1x32xf32> to vector<16x32xf32>
    %6 = arith.addf %3, %5 : vector<16x32xf32>
    %7 = arith.truncf %6 : vector<16x32xf32> to vector<16x32xbf16>
    %c0_5 = arith.constant 0 : index
    %c0_6 = arith.constant 0 : index
    %8 = vector.load %arg5[%c0_5, %c0_6] : memref<16x32xbf16, #tpu.memory_space<vmem>>, vector<16x32xbf16>
    tpu.vector_store %arg5[%c0_5, %c0_6], %7 {strides = array<i32>} : memref<16x32xbf16, #tpu.memory_space<vmem>>, vector<16x32xbf16>,
    return
  }
  func.func @transform_0(%arg0: i32, %arg1: i32) -> (i32, i32) {
    %c0_i32 = arith.constant 0 : i32
    %c0_i32_0 = arith.constant 0 : i32
    return %arg0, %c0_i32 : i32, i32
  }
  func.func @transform_1(%arg0: i32, %arg1: i32) -> (i32, i32) {
    %c0_i32 = arith.constant 0 : i32
    %c0_i32_0 = arith.constant 0 : i32
    return %c0_i32, %arg1 : i32, i32
  }
  func.func @transform_2(%arg0: i32, %arg1: i32) -> (i32, i32) {
    %c0_i32 = arith.constant 0 : i32
    %c0_i32_0 = arith.constant 0 : i32
    return %c0_i32, %arg1 : i32, i32
  }
  func.func @transform_3(%arg0: i32, %arg1: i32) -> (i32, i32) {
    %c0_i32 = arith.constant 0 : i32
    return %arg0, %arg1 : i32, i32
  }
}

module attributes {stable_mosaic.version = 11 : i64} {
  func.func @_flash_attn_kernel(%arg0: i32, %arg1: i32, %arg2: i32, %arg3: i32, %arg4: memref<1x8x32xbf16, #tpu.memory_space<vmem>>, %arg5: memref<1x8x32xbf16, #tpu.memory_space<vmem>>, %arg6: memref<1x8x32xbf16, #tpu.memory_space<vmem>>, %arg7: memref<1x8x32xbf16, #tpu.memory_space<vmem>>, %arg8: memref<4x8x1xf32, #tpu.memory_space<vmem>>, %arg9: memref<4x8x1xf32, #tpu.memory_space<vmem>>, %arg10: memref<4x8x8xf32, #tpu.memory_space<vmem>>) attributes {dimension_semantics = [#tpu.dimension_semantics<parallel>, #tpu.dimension_semantics<parallel>, #tpu.dimension_semantics<parallel>, #tpu.dimension_semantics<arbitrary>], iteration_bounds = array<i64: 2, 1, 1, 1>, scalar_prefetch = 0 : i64, scratch_operands = 3 : i64, tpu.core_type = #tpu.core_type<tc>, window_params = [{transform_indices = @transform_0, window_bounds = array<i64: 1, 8, 32>}, {transform_indices = @transform_1, window_bounds = array<i64: 1, 8, 32>}, {transform_indices = @transform_2, window_bounds = array<i64: 1, 8, 32>}, {transform_indices = @transform_3, window_bounds = array<i64: 1, 8, 32>}]} {
    %c0_i32 = arith.constant 0 : i32
    %0 = arith.cmpi eq, %arg3, %c0_i32 : i32
    %1 = arith.extui %0 : i1 to i32
    %c0_i32_0 = arith.constant 0 : i32
    %2 = arith.cmpi ne, %1, %c0_i32_0 : i32
    scf.if %2 {
      %cst_96 = arith.constant 0xFF800000 : f32
      %158 = vector.broadcast %cst_96 : f32 to vector<4x8x1xf32>
      %c0_97 = arith.constant 0 : index
      %c0_98 = arith.constant 0 : index
      %c0_99 = arith.constant 0 : index
      %159 = vector.load %arg8[%c0_97, %c0_98, %c0_99] : memref<4x8x1xf32, #tpu.memory_space<vmem>>, vector<4x8x1xf32>
      tpu.vector_store %arg8[%c0_97, %c0_98, %c0_99], %158 {strides = array<i32>} : memref<4x8x1xf32, #tpu.memory_space<vmem>>, vector<4x8x1xf32>,
      %cst_100 = arith.constant 0.000000e+00 : f32
      %160 = vector.broadcast %cst_100 : f32 to vector<4x8x1xf32>
      %c0_101 = arith.constant 0 : index
      %c0_102 = arith.constant 0 : index
      %c0_103 = arith.constant 0 : index
      %161 = vector.load %arg9[%c0_101, %c0_102, %c0_103] : memref<4x8x1xf32, #tpu.memory_space<vmem>>, vector<4x8x1xf32>
      tpu.vector_store %arg9[%c0_101, %c0_102, %c0_103], %160 {strides = array<i32>} : memref<4x8x1xf32, #tpu.memory_space<vmem>>, vector<4x8x1xf32>,
      %cst_104 = arith.constant 0.000000e+00 : f32
      %162 = vector.broadcast %cst_104 : f32 to vector<4x8x8xf32>
      %c0_105 = arith.constant 0 : index
      %c0_106 = arith.constant 0 : index
      %c0_107 = arith.constant 0 : index
      %163 = vector.load %arg10[%c0_105, %c0_106, %c0_107] : memref<4x8x8xf32, #tpu.memory_space<vmem>>, vector<4x8x8xf32>
      tpu.vector_store %arg10[%c0_105, %c0_106, %c0_107], %162 {strides = array<i32>} : memref<4x8x8xf32, #tpu.memory_space<vmem>>, vector<4x8x8xf32>,
    } else {
    }
    %c0 = arith.constant 0 : index
    %c0_1 = arith.constant 0 : index
    %c0_2 = arith.constant 0 : index
    %3 = vector.load %arg4[%c0, %c0_1, %c0_2] : memref<1x8x32xbf16, #tpu.memory_space<vmem>>, vector<1x8x32xbf16>
    %4 = vector.shape_cast %3 : vector<1x8x32xbf16> to vector<8x32xbf16>
    %cst = arith.constant 3.535160e-01 : bf16
    %5 = vector.broadcast %cst : bf16 to vector<8x32xbf16>
    %6 = arith.mulf %4, %5 : vector<8x32xbf16>
    %c0_3 = arith.constant 0 : index
    %c0_4 = arith.constant 0 : index
    %c0_5 = arith.constant 0 : index
    %7 = vector.load %arg5[%c0_3, %c0_4, %c0_5] : memref<1x8x32xbf16, #tpu.memory_space<vmem>>, vector<1x8x32xbf16>
    %8 = vector.shape_cast %7 : vector<1x8x32xbf16> to vector<8x32xbf16>
    %c0_6 = arith.constant 0 : index
    %c0_7 = arith.constant 0 : index
    %c0_8 = arith.constant 0 : index
    %9 = vector.load %arg6[%c0_6, %c0_7, %c0_8] : memref<1x8x32xbf16, #tpu.memory_space<vmem>>, vector<1x8x32xbf16>
    %10 = vector.shape_cast %9 : vector<1x8x32xbf16> to vector<8x32xbf16>
    %11 = vector.extract_strided_slice %6 {offsets = [0, 0], sizes = [8, 8], strides = [1, 1]} : vector<8x32xbf16> to vector<8x8xbf16>
    %12 = vector.extract_strided_slice %8 {offsets = [0, 0], sizes = [8, 8], strides = [1, 1]} : vector<8x32xbf16> to vector<8x8xbf16>
    %cst_9 = arith.constant dense<0.000000e+00> : vector<8x8xf32>
    %13 = tpu.matmul %11, %12, %cst_9 {dimension_numbers = #tpu.dot_dimension_numbers<[1], [1], [0], [0], [0, 0, 1, 0], [], []>} : vector<8x8xbf16>, vector<8x8xbf16>, vector<8x8xf32> -> vector<8x8xf32>
    %c0_10 = arith.constant 0 : index
    %c0_11 = arith.constant 0 : index
    %c0_12 = arith.constant 0 : index
    %14 = vector.load %arg8[%c0_10, %c0_11, %c0_12] : memref<4x8x1xf32, #tpu.memory_space<vmem>>, vector<1x8x1xf32>
    %15 = vector.shape_cast %14 : vector<1x8x1xf32> to vector<8x1xf32>
    %cst_13 = arith.constant dense<0xFF800000> : vector<8xf32>
    %16 = vector.multi_reduction <maximumf>, %13, %cst_13 [1] : vector<8x8xf32> to vector<8xf32>
    %17 = vector.shape_cast %16 : vector<8xf32> to vector<8x1xf32>
    %18 = arith.maximumf %15, %17 : vector<8x1xf32>
    %19 = arith.subf %15, %18 : vector<8x1xf32>
    %20 = math.exp %19 : vector<8x1xf32>
    %21 = vector.broadcast %18 : vector<8x1xf32> to vector<8x8xf32>
    %22 = arith.subf %13, %21 : vector<8x8xf32>
    %23 = math.exp %22 : vector<8x8xf32>
    %c0_14 = arith.constant 0 : index
    %c0_15 = arith.constant 0 : index
    %c0_16 = arith.constant 0 : index
    %24 = vector.load %arg9[%c0_14, %c0_15, %c0_16] : memref<4x8x1xf32, #tpu.memory_space<vmem>>, vector<1x8x1xf32>
    %25 = vector.shape_cast %24 : vector<1x8x1xf32> to vector<8x1xf32>
    %26 = arith.mulf %20, %25 : vector<8x1xf32>
    %cst_17 = arith.constant dense<0.000000e+00> : vector<8xf32>
    %27 = vector.multi_reduction <add>, %23, %cst_17 [1] : vector<8x8xf32> to vector<8xf32>
    %28 = vector.shape_cast %27 : vector<8xf32> to vector<8x1xf32>
    %29 = arith.addf %26, %28 : vector<8x1xf32>
    %c0_18 = arith.constant 0 : index
    %c0_19 = arith.constant 0 : index
    %c0_20 = arith.constant 0 : index
    %30 = vector.load %arg9[%c0_18, %c0_19, %c0_20] : memref<4x8x1xf32, #tpu.memory_space<vmem>>, vector<1x8x1xf32>
    %31 = vector.shape_cast %30 : vector<1x8x1xf32> to vector<8x1xf32>
    %32 = vector.shape_cast %29 : vector<8x1xf32> to vector<1x8x1xf32>
    tpu.vector_store %arg9[%c0_18, %c0_19, %c0_20], %32 {strides = array<i32>} : memref<4x8x1xf32, #tpu.memory_space<vmem>>, vector<1x8x1xf32>,
    %c0_21 = arith.constant 0 : index
    %c0_22 = arith.constant 0 : index
    %c0_23 = arith.constant 0 : index
    %33 = vector.load %arg10[%c0_21, %c0_22, %c0_23] : memref<4x8x8xf32, #tpu.memory_space<vmem>>, vector<1x8x8xf32>
    %34 = vector.shape_cast %33 : vector<1x8x8xf32> to vector<8x8xf32>
    %35 = vector.broadcast %20 : vector<8x1xf32> to vector<8x8xf32>
    %36 = arith.mulf %35, %34 : vector<8x8xf32>
    %37 = arith.truncf %23 : vector<8x8xf32> to vector<8x8xbf16>
    %38 = vector.extract_strided_slice %10 {offsets = [0, 0], sizes = [8, 8], strides = [1, 1]} : vector<8x32xbf16> to vector<8x8xbf16>
    %cst_24 = arith.constant dense<0.000000e+00> : vector<8x8xf32>
    %39 = tpu.matmul %37, %38, %cst_24 {dimension_numbers = #tpu.dot_dimension_numbers<[1], [0], [0], [1], [0, 0, 1, 1], [], []>} : vector<8x8xbf16>, vector<8x8xbf16>, vector<8x8xf32> -> vector<8x8xf32>
    %40 = arith.addf %36, %39 : vector<8x8xf32>
    %c0_25 = arith.constant 0 : index
    %c0_26 = arith.constant 0 : index
    %c0_27 = arith.constant 0 : index
    %41 = vector.load %arg10[%c0_25, %c0_26, %c0_27] : memref<4x8x8xf32, #tpu.memory_space<vmem>>, vector<1x8x8xf32>
    %42 = vector.shape_cast %41 : vector<1x8x8xf32> to vector<8x8xf32>
    %43 = vector.shape_cast %40 : vector<8x8xf32> to vector<1x8x8xf32>
    tpu.vector_store %arg10[%c0_25, %c0_26, %c0_27], %43 {strides = array<i32>} : memref<4x8x8xf32, #tpu.memory_space<vmem>>, vector<1x8x8xf32>,
    %c0_28 = arith.constant 0 : index
    %c0_29 = arith.constant 0 : index
    %c0_30 = arith.constant 0 : index
    %44 = vector.load %arg8[%c0_28, %c0_29, %c0_30] : memref<4x8x1xf32, #tpu.memory_space<vmem>>, vector<1x8x1xf32>
    %45 = vector.shape_cast %44 : vector<1x8x1xf32> to vector<8x1xf32>
    %46 = vector.shape_cast %18 : vector<8x1xf32> to vector<1x8x1xf32>
    tpu.vector_store %arg8[%c0_28, %c0_29, %c0_30], %46 {strides = array<i32>} : memref<4x8x1xf32, #tpu.memory_space<vmem>>, vector<1x8x1xf32>,
    %47 = vector.extract_strided_slice %6 {offsets = [0, 8], sizes = [8, 8], strides = [1, 1]} : vector<8x32xbf16> to vector<8x8xbf16>
    %48 = vector.extract_strided_slice %8 {offsets = [0, 8], sizes = [8, 8], strides = [1, 1]} : vector<8x32xbf16> to vector<8x8xbf16>
    %cst_31 = arith.constant dense<0.000000e+00> : vector<8x8xf32>
    %49 = tpu.matmul %47, %48, %cst_31 {dimension_numbers = #tpu.dot_dimension_numbers<[1], [1], [0], [0], [0, 0, 1, 0], [], []>} : vector<8x8xbf16>, vector<8x8xbf16>, vector<8x8xf32> -> vector<8x8xf32>
    %c1 = arith.constant 1 : index
    %c0_32 = arith.constant 0 : index
    %c0_33 = arith.constant 0 : index
    %50 = vector.load %arg8[%c1, %c0_32, %c0_33] : memref<4x8x1xf32, #tpu.memory_space<vmem>>, vector<1x8x1xf32>
    %51 = vector.shape_cast %50 : vector<1x8x1xf32> to vector<8x1xf32>
    %cst_34 = arith.constant dense<0xFF800000> : vector<8xf32>
    %52 = vector.multi_reduction <maximumf>, %49, %cst_34 [1] : vector<8x8xf32> to vector<8xf32>
    %53 = vector.shape_cast %52 : vector<8xf32> to vector<8x1xf32>
    %54 = arith.maximumf %51, %53 : vector<8x1xf32>
    %55 = arith.subf %51, %54 : vector<8x1xf32>
    %56 = math.exp %55 : vector<8x1xf32>
    %57 = vector.broadcast %54 : vector<8x1xf32> to vector<8x8xf32>
    %58 = arith.subf %49, %57 : vector<8x8xf32>
    %59 = math.exp %58 : vector<8x8xf32>
    %c1_35 = arith.constant 1 : index
    %c0_36 = arith.constant 0 : index
    %c0_37 = arith.constant 0 : index
    %60 = vector.load %arg9[%c1_35, %c0_36, %c0_37] : memref<4x8x1xf32, #tpu.memory_space<vmem>>, vector<1x8x1xf32>
    %61 = vector.shape_cast %60 : vector<1x8x1xf32> to vector<8x1xf32>
    %62 = arith.mulf %56, %61 : vector<8x1xf32>
    %cst_38 = arith.constant dense<0.000000e+00> : vector<8xf32>
    %63 = vector.multi_reduction <add>, %59, %cst_38 [1] : vector<8x8xf32> to vector<8xf32>
    %64 = vector.shape_cast %63 : vector<8xf32> to vector<8x1xf32>
    %65 = arith.addf %62, %64 : vector<8x1xf32>
    %c1_39 = arith.constant 1 : index
    %c0_40 = arith.constant 0 : index
    %c0_41 = arith.constant 0 : index
    %66 = vector.load %arg9[%c1_39, %c0_40, %c0_41] : memref<4x8x1xf32, #tpu.memory_space<vmem>>, vector<1x8x1xf32>
    %67 = vector.shape_cast %66 : vector<1x8x1xf32> to vector<8x1xf32>
    %68 = vector.shape_cast %65 : vector<8x1xf32> to vector<1x8x1xf32>
    tpu.vector_store %arg9[%c1_39, %c0_40, %c0_41], %68 {strides = array<i32>} : memref<4x8x1xf32, #tpu.memory_space<vmem>>, vector<1x8x1xf32>,
    %c1_42 = arith.constant 1 : index
    %c0_43 = arith.constant 0 : index
    %c0_44 = arith.constant 0 : index
    %69 = vector.load %arg10[%c1_42, %c0_43, %c0_44] : memref<4x8x8xf32, #tpu.memory_space<vmem>>, vector<1x8x8xf32>
    %70 = vector.shape_cast %69 : vector<1x8x8xf32> to vector<8x8xf32>
    %71 = vector.broadcast %56 : vector<8x1xf32> to vector<8x8xf32>
    %72 = arith.mulf %71, %70 : vector<8x8xf32>
    %73 = arith.truncf %59 : vector<8x8xf32> to vector<8x8xbf16>
    %74 = vector.extract_strided_slice %10 {offsets = [0, 8], sizes = [8, 8], strides = [1, 1]} : vector<8x32xbf16> to vector<8x8xbf16>
    %cst_45 = arith.constant dense<0.000000e+00> : vector<8x8xf32>
    %75 = tpu.matmul %73, %74, %cst_45 {dimension_numbers = #tpu.dot_dimension_numbers<[1], [0], [0], [1], [0, 0, 1, 1], [], []>} : vector<8x8xbf16>, vector<8x8xbf16>, vector<8x8xf32> -> vector<8x8xf32>
    %76 = arith.addf %72, %75 : vector<8x8xf32>
    %c1_46 = arith.constant 1 : index
    %c0_47 = arith.constant 0 : index
    %c0_48 = arith.constant 0 : index
    %77 = vector.load %arg10[%c1_46, %c0_47, %c0_48] : memref<4x8x8xf32, #tpu.memory_space<vmem>>, vector<1x8x8xf32>
    %78 = vector.shape_cast %77 : vector<1x8x8xf32> to vector<8x8xf32>
    %79 = vector.shape_cast %76 : vector<8x8xf32> to vector<1x8x8xf32>
    tpu.vector_store %arg10[%c1_46, %c0_47, %c0_48], %79 {strides = array<i32>} : memref<4x8x8xf32, #tpu.memory_space<vmem>>, vector<1x8x8xf32>,
    %c1_49 = arith.constant 1 : index
    %c0_50 = arith.constant 0 : index
    %c0_51 = arith.constant 0 : index
    %80 = vector.load %arg8[%c1_49, %c0_50, %c0_51] : memref<4x8x1xf32, #tpu.memory_space<vmem>>, vector<1x8x1xf32>
    %81 = vector.shape_cast %80 : vector<1x8x1xf32> to vector<8x1xf32>
    %82 = vector.shape_cast %54 : vector<8x1xf32> to vector<1x8x1xf32>
    tpu.vector_store %arg8[%c1_49, %c0_50, %c0_51], %82 {strides = array<i32>} : memref<4x8x1xf32, #tpu.memory_space<vmem>>, vector<1x8x1xf32>,
    %83 = vector.extract_strided_slice %6 {offsets = [0, 16], sizes = [8, 8], strides = [1, 1]} : vector<8x32xbf16> to vector<8x8xbf16>
    %84 = vector.extract_strided_slice %8 {offsets = [0, 16], sizes = [8, 8], strides = [1, 1]} : vector<8x32xbf16> to vector<8x8xbf16>
    %cst_52 = arith.constant dense<0.000000e+00> : vector<8x8xf32>
    %85 = tpu.matmul %83, %84, %cst_52 {dimension_numbers = #tpu.dot_dimension_numbers<[1], [1], [0], [0], [0, 0, 1, 0], [], []>} : vector<8x8xbf16>, vector<8x8xbf16>, vector<8x8xf32> -> vector<8x8xf32>
    %c2 = arith.constant 2 : index
    %c0_53 = arith.constant 0 : index
    %c0_54 = arith.constant 0 : index
    %86 = vector.load %arg8[%c2, %c0_53, %c0_54] : memref<4x8x1xf32, #tpu.memory_space<vmem>>, vector<1x8x1xf32>
    %87 = vector.shape_cast %86 : vector<1x8x1xf32> to vector<8x1xf32>
    %cst_55 = arith.constant dense<0xFF800000> : vector<8xf32>
    %88 = vector.multi_reduction <maximumf>, %85, %cst_55 [1] : vector<8x8xf32> to vector<8xf32>
    %89 = vector.shape_cast %88 : vector<8xf32> to vector<8x1xf32>
    %90 = arith.maximumf %87, %89 : vector<8x1xf32>
    %91 = arith.subf %87, %90 : vector<8x1xf32>
    %92 = math.exp %91 : vector<8x1xf32>
    %93 = vector.broadcast %90 : vector<8x1xf32> to vector<8x8xf32>
    %94 = arith.subf %85, %93 : vector<8x8xf32>
    %95 = math.exp %94 : vector<8x8xf32>
    %c2_56 = arith.constant 2 : index
    %c0_57 = arith.constant 0 : index
    %c0_58 = arith.constant 0 : index
    %96 = vector.load %arg9[%c2_56, %c0_57, %c0_58] : memref<4x8x1xf32, #tpu.memory_space<vmem>>, vector<1x8x1xf32>
    %97 = vector.shape_cast %96 : vector<1x8x1xf32> to vector<8x1xf32>
    %98 = arith.mulf %92, %97 : vector<8x1xf32>
    %cst_59 = arith.constant dense<0.000000e+00> : vector<8xf32>
    %99 = vector.multi_reduction <add>, %95, %cst_59 [1] : vector<8x8xf32> to vector<8xf32>
    %100 = vector.shape_cast %99 : vector<8xf32> to vector<8x1xf32>
    %101 = arith.addf %98, %100 : vector<8x1xf32>
    %c2_60 = arith.constant 2 : index
    %c0_61 = arith.constant 0 : index
    %c0_62 = arith.constant 0 : index
    %102 = vector.load %arg9[%c2_60, %c0_61, %c0_62] : memref<4x8x1xf32, #tpu.memory_space<vmem>>, vector<1x8x1xf32>
    %103 = vector.shape_cast %102 : vector<1x8x1xf32> to vector<8x1xf32>
    %104 = vector.shape_cast %101 : vector<8x1xf32> to vector<1x8x1xf32>
    tpu.vector_store %arg9[%c2_60, %c0_61, %c0_62], %104 {strides = array<i32>} : memref<4x8x1xf32, #tpu.memory_space<vmem>>, vector<1x8x1xf32>,
    %c2_63 = arith.constant 2 : index
    %c0_64 = arith.constant 0 : index
    %c0_65 = arith.constant 0 : index
    %105 = vector.load %arg10[%c2_63, %c0_64, %c0_65] : memref<4x8x8xf32, #tpu.memory_space<vmem>>, vector<1x8x8xf32>
    %106 = vector.shape_cast %105 : vector<1x8x8xf32> to vector<8x8xf32>
    %107 = vector.broadcast %92 : vector<8x1xf32> to vector<8x8xf32>
    %108 = arith.mulf %107, %106 : vector<8x8xf32>
    %109 = arith.truncf %95 : vector<8x8xf32> to vector<8x8xbf16>
    %110 = vector.extract_strided_slice %10 {offsets = [0, 16], sizes = [8, 8], strides = [1, 1]} : vector<8x32xbf16> to vector<8x8xbf16>
    %cst_66 = arith.constant dense<0.000000e+00> : vector<8x8xf32>
    %111 = tpu.matmul %109, %110, %cst_66 {dimension_numbers = #tpu.dot_dimension_numbers<[1], [0], [0], [1], [0, 0, 1, 1], [], []>} : vector<8x8xbf16>, vector<8x8xbf16>, vector<8x8xf32> -> vector<8x8xf32>
    %112 = arith.addf %108, %111 : vector<8x8xf32>
    %c2_67 = arith.constant 2 : index
    %c0_68 = arith.constant 0 : index
    %c0_69 = arith.constant 0 : index
    %113 = vector.load %arg10[%c2_67, %c0_68, %c0_69] : memref<4x8x8xf32, #tpu.memory_space<vmem>>, vector<1x8x8xf32>
    %114 = vector.shape_cast %113 : vector<1x8x8xf32> to vector<8x8xf32>
    %115 = vector.shape_cast %112 : vector<8x8xf32> to vector<1x8x8xf32>
    tpu.vector_store %arg10[%c2_67, %c0_68, %c0_69], %115 {strides = array<i32>} : memref<4x8x8xf32, #tpu.memory_space<vmem>>, vector<1x8x8xf32>,
    %c2_70 = arith.constant 2 : index
    %c0_71 = arith.constant 0 : index
    %c0_72 = arith.constant 0 : index
    %116 = vector.load %arg8[%c2_70, %c0_71, %c0_72] : memref<4x8x1xf32, #tpu.memory_space<vmem>>, vector<1x8x1xf32>
    %117 = vector.shape_cast %116 : vector<1x8x1xf32> to vector<8x1xf32>
    %118 = vector.shape_cast %90 : vector<8x1xf32> to vector<1x8x1xf32>
    tpu.vector_store %arg8[%c2_70, %c0_71, %c0_72], %118 {strides = array<i32>} : memref<4x8x1xf32, #tpu.memory_space<vmem>>, vector<1x8x1xf32>,
    %119 = vector.extract_strided_slice %6 {offsets = [0, 24], sizes = [8, 8], strides = [1, 1]} : vector<8x32xbf16> to vector<8x8xbf16>
    %120 = vector.extract_strided_slice %8 {offsets = [0, 24], sizes = [8, 8], strides = [1, 1]} : vector<8x32xbf16> to vector<8x8xbf16>
    %cst_73 = arith.constant dense<0.000000e+00> : vector<8x8xf32>
    %121 = tpu.matmul %119, %120, %cst_73 {dimension_numbers = #tpu.dot_dimension_numbers<[1], [1], [0], [0], [0, 0, 1, 0], [], []>} : vector<8x8xbf16>, vector<8x8xbf16>, vector<8x8xf32> -> vector<8x8xf32>
    %c3 = arith.constant 3 : index
    %c0_74 = arith.constant 0 : index
    %c0_75 = arith.constant 0 : index
    %122 = vector.load %arg8[%c3, %c0_74, %c0_75] : memref<4x8x1xf32, #tpu.memory_space<vmem>>, vector<1x8x1xf32>
    %123 = vector.shape_cast %122 : vector<1x8x1xf32> to vector<8x1xf32>
    %cst_76 = arith.constant dense<0xFF800000> : vector<8xf32>
    %124 = vector.multi_reduction <maximumf>, %121, %cst_76 [1] : vector<8x8xf32> to vector<8xf32>
    %125 = vector.shape_cast %124 : vector<8xf32> to vector<8x1xf32>
    %126 = arith.maximumf %123, %125 : vector<8x1xf32>
    %127 = arith.subf %123, %126 : vector<8x1xf32>
    %128 = math.exp %127 : vector<8x1xf32>
    %129 = vector.broadcast %126 : vector<8x1xf32> to vector<8x8xf32>
    %130 = arith.subf %121, %129 : vector<8x8xf32>
    %131 = math.exp %130 : vector<8x8xf32>
    %c3_77 = arith.constant 3 : index
    %c0_78 = arith.constant 0 : index
    %c0_79 = arith.constant 0 : index
    %132 = vector.load %arg9[%c3_77, %c0_78, %c0_79] : memref<4x8x1xf32, #tpu.memory_space<vmem>>, vector<1x8x1xf32>
    %133 = vector.shape_cast %132 : vector<1x8x1xf32> to vector<8x1xf32>
    %134 = arith.mulf %128, %133 : vector<8x1xf32>
    %cst_80 = arith.constant dense<0.000000e+00> : vector<8xf32>
    %135 = vector.multi_reduction <add>, %131, %cst_80 [1] : vector<8x8xf32> to vector<8xf32>
    %136 = vector.shape_cast %135 : vector<8xf32> to vector<8x1xf32>
    %137 = arith.addf %134, %136 : vector<8x1xf32>
    %c3_81 = arith.constant 3 : index
    %c0_82 = arith.constant 0 : index
    %c0_83 = arith.constant 0 : index
    %138 = vector.load %arg9[%c3_81, %c0_82, %c0_83] : memref<4x8x1xf32, #tpu.memory_space<vmem>>, vector<1x8x1xf32>
    %139 = vector.shape_cast %138 : vector<1x8x1xf32> to vector<8x1xf32>
    %140 = vector.shape_cast %137 : vector<8x1xf32> to vector<1x8x1xf32>
    tpu.vector_store %arg9[%c3_81, %c0_82, %c0_83], %140 {strides = array<i32>} : memref<4x8x1xf32, #tpu.memory_space<vmem>>, vector<1x8x1xf32>,
    %c3_84 = arith.constant 3 : index
    %c0_85 = arith.constant 0 : index
    %c0_86 = arith.constant 0 : index
    %141 = vector.load %arg10[%c3_84, %c0_85, %c0_86] : memref<4x8x8xf32, #tpu.memory_space<vmem>>, vector<1x8x8xf32>
    %142 = vector.shape_cast %141 : vector<1x8x8xf32> to vector<8x8xf32>
    %143 = vector.broadcast %128 : vector<8x1xf32> to vector<8x8xf32>
    %144 = arith.mulf %143, %142 : vector<8x8xf32>
    %145 = arith.truncf %131 : vector<8x8xf32> to vector<8x8xbf16>
    %146 = vector.extract_strided_slice %10 {offsets = [0, 24], sizes = [8, 8], strides = [1, 1]} : vector<8x32xbf16> to vector<8x8xbf16>
    %cst_87 = arith.constant dense<0.000000e+00> : vector<8x8xf32>
    %147 = tpu.matmul %145, %146, %cst_87 {dimension_numbers = #tpu.dot_dimension_numbers<[1], [0], [0], [1], [0, 0, 1, 1], [], []>} : vector<8x8xbf16>, vector<8x8xbf16>, vector<8x8xf32> -> vector<8x8xf32>
    %148 = arith.addf %144, %147 : vector<8x8xf32>
    %c3_88 = arith.constant 3 : index
    %c0_89 = arith.constant 0 : index
    %c0_90 = arith.constant 0 : index
    %149 = vector.load %arg10[%c3_88, %c0_89, %c0_90] : memref<4x8x8xf32, #tpu.memory_space<vmem>>, vector<1x8x8xf32>
    %150 = vector.shape_cast %149 : vector<1x8x8xf32> to vector<8x8xf32>
    %151 = vector.shape_cast %148 : vector<8x8xf32> to vector<1x8x8xf32>
    tpu.vector_store %arg10[%c3_88, %c0_89, %c0_90], %151 {strides = array<i32>} : memref<4x8x8xf32, #tpu.memory_space<vmem>>, vector<1x8x8xf32>,
    %c3_91 = arith.constant 3 : index
    %c0_92 = arith.constant 0 : index
    %c0_93 = arith.constant 0 : index
    %152 = vector.load %arg8[%c3_91, %c0_92, %c0_93] : memref<4x8x1xf32, #tpu.memory_space<vmem>>, vector<1x8x1xf32>
    %153 = vector.shape_cast %152 : vector<1x8x1xf32> to vector<8x1xf32>
    %154 = vector.shape_cast %126 : vector<8x1xf32> to vector<1x8x1xf32>
    tpu.vector_store %arg8[%c3_91, %c0_92, %c0_93], %154 {strides = array<i32>} : memref<4x8x1xf32, #tpu.memory_space<vmem>>, vector<1x8x1xf32>,
    %c0_i32_94 = arith.constant 0 : i32
    %155 = arith.cmpi eq, %arg3, %c0_i32_94 : i32
    %156 = arith.extui %155 : i1 to i32
    %c0_i32_95 = arith.constant 0 : i32
    %157 = arith.cmpi ne, %156, %c0_i32_95 : i32
    scf.if %157 {
      %c0_96 = arith.constant 0 : index
      %c0_97 = arith.constant 0 : index
      %c0_98 = arith.constant 0 : index
      %158 = vector.load %arg9[%c0_96, %c0_97, %c0_98] : memref<4x8x1xf32, #tpu.memory_space<vmem>>, vector<1x8x1xf32>
      %159 = vector.shape_cast %158 : vector<1x8x1xf32> to vector<8x1xf32>
      %160 = tpu.reciprocal %159 {approx = true} : vector<8x1xf32> -> vector<8x1xf32>
      %c0_99 = arith.constant 0 : index
      %c0_100 = arith.constant 0 : index
      %c0_101 = arith.constant 0 : index
      %161 = vector.load %arg10[%c0_99, %c0_100, %c0_101] : memref<4x8x8xf32, #tpu.memory_space<vmem>>, vector<1x8x8xf32>
      %162 = vector.shape_cast %161 : vector<1x8x8xf32> to vector<8x8xf32>
      %163 = vector.broadcast %160 : vector<8x1xf32> to vector<8x8xf32>
      %164 = arith.mulf %162, %163 : vector<8x8xf32>
      %165 = arith.truncf %164 : vector<8x8xf32> to vector<8x8xbf16>
      %c0_102 = arith.constant 0 : index
      %c0_103 = arith.constant 0 : index
      %c0_104 = arith.constant 0 : index
      %166 = vector.load %arg7[%c0_102, %c0_103, %c0_104] : memref<1x8x32xbf16, #tpu.memory_space<vmem>>, vector<1x8x8xbf16>
      %167 = vector.shape_cast %166 : vector<1x8x8xbf16> to vector<8x8xbf16>
      %168 = vector.shape_cast %165 : vector<8x8xbf16> to vector<1x8x8xbf16>
      tpu.vector_store %arg7[%c0_102, %c0_103, %c0_104], %168 {strides = array<i32>} : memref<1x8x32xbf16, #tpu.memory_space<vmem>>, vector<1x8x8xbf16>,
      %c1_105 = arith.constant 1 : index
      %c0_106 = arith.constant 0 : index
      %c0_107 = arith.constant 0 : index
      %169 = vector.load %arg9[%c1_105, %c0_106, %c0_107] : memref<4x8x1xf32, #tpu.memory_space<vmem>>, vector<1x8x1xf32>
      %170 = vector.shape_cast %169 : vector<1x8x1xf32> to vector<8x1xf32>
      %171 = tpu.reciprocal %170 {approx = true} : vector<8x1xf32> -> vector<8x1xf32>
      %c1_108 = arith.constant 1 : index
      %c0_109 = arith.constant 0 : index
      %c0_110 = arith.constant 0 : index
      %172 = vector.load %arg10[%c1_108, %c0_109, %c0_110] : memref<4x8x8xf32, #tpu.memory_space<vmem>>, vector<1x8x8xf32>
      %173 = vector.shape_cast %172 : vector<1x8x8xf32> to vector<8x8xf32>
      %174 = vector.broadcast %171 : vector<8x1xf32> to vector<8x8xf32>
      %175 = arith.mulf %173, %174 : vector<8x8xf32>
      %176 = arith.truncf %175 : vector<8x8xf32> to vector<8x8xbf16>
      %c0_111 = arith.constant 0 : index
      %c0_112 = arith.constant 0 : index
      %c8 = arith.constant 8 : index
      %177 = vector.load %arg7[%c0_111, %c0_112, %c8] : memref<1x8x32xbf16, #tpu.memory_space<vmem>>, vector<1x8x8xbf16>
      %178 = vector.shape_cast %177 : vector<1x8x8xbf16> to vector<8x8xbf16>
      %179 = vector.shape_cast %176 : vector<8x8xbf16> to vector<1x8x8xbf16>
      tpu.vector_store %arg7[%c0_111, %c0_112, %c8], %179 {strides = array<i32>} : memref<1x8x32xbf16, #tpu.memory_space<vmem>>, vector<1x8x8xbf16>,
      %c2_113 = arith.constant 2 : index
      %c0_114 = arith.constant 0 : index
      %c0_115 = arith.constant 0 : index
      %180 = vector.load %arg9[%c2_113, %c0_114, %c0_115] : memref<4x8x1xf32, #tpu.memory_space<vmem>>, vector<1x8x1xf32>
      %181 = vector.shape_cast %180 : vector<1x8x1xf32> to vector<8x1xf32>
      %182 = tpu.reciprocal %181 {approx = true} : vector<8x1xf32> -> vector<8x1xf32>
      %c2_116 = arith.constant 2 : index
      %c0_117 = arith.constant 0 : index
      %c0_118 = arith.constant 0 : index
      %183 = vector.load %arg10[%c2_116, %c0_117, %c0_118] : memref<4x8x8xf32, #tpu.memory_space<vmem>>, vector<1x8x8xf32>
      %184 = vector.shape_cast %183 : vector<1x8x8xf32> to vector<8x8xf32>
      %185 = vector.broadcast %182 : vector<8x1xf32> to vector<8x8xf32>
      %186 = arith.mulf %184, %185 : vector<8x8xf32>
      %187 = arith.truncf %186 : vector<8x8xf32> to vector<8x8xbf16>
      %c0_119 = arith.constant 0 : index
      %c0_120 = arith.constant 0 : index
      %c16 = arith.constant 16 : index
      %188 = vector.load %arg7[%c0_119, %c0_120, %c16] : memref<1x8x32xbf16, #tpu.memory_space<vmem>>, vector<1x8x8xbf16>
      %189 = vector.shape_cast %188 : vector<1x8x8xbf16> to vector<8x8xbf16>
      %190 = vector.shape_cast %187 : vector<8x8xbf16> to vector<1x8x8xbf16>
      tpu.vector_store %arg7[%c0_119, %c0_120, %c16], %190 {strides = array<i32>} : memref<1x8x32xbf16, #tpu.memory_space<vmem>>, vector<1x8x8xbf16>,
      %c3_121 = arith.constant 3 : index
      %c0_122 = arith.constant 0 : index
      %c0_123 = arith.constant 0 : index
      %191 = vector.load %arg9[%c3_121, %c0_122, %c0_123] : memref<4x8x1xf32, #tpu.memory_space<vmem>>, vector<1x8x1xf32>
      %192 = vector.shape_cast %191 : vector<1x8x1xf32> to vector<8x1xf32>
      %193 = tpu.reciprocal %192 {approx = true} : vector<8x1xf32> -> vector<8x1xf32>
      %c3_124 = arith.constant 3 : index
      %c0_125 = arith.constant 0 : index
      %c0_126 = arith.constant 0 : index
      %194 = vector.load %arg10[%c3_124, %c0_125, %c0_126] : memref<4x8x8xf32, #tpu.memory_space<vmem>>, vector<1x8x8xf32>
      %195 = vector.shape_cast %194 : vector<1x8x8xf32> to vector<8x8xf32>
      %196 = vector.broadcast %193 : vector<8x1xf32> to vector<8x8xf32>
      %197 = arith.mulf %195, %196 : vector<8x8xf32>
      %198 = arith.truncf %197 : vector<8x8xf32> to vector<8x8xbf16>
      %c0_127 = arith.constant 0 : index
      %c0_128 = arith.constant 0 : index
      %c24 = arith.constant 24 : index
      %199 = vector.load %arg7[%c0_127, %c0_128, %c24] : memref<1x8x32xbf16, #tpu.memory_space<vmem>>, vector<1x8x8xbf16>
      %200 = vector.shape_cast %199 : vector<1x8x8xbf16> to vector<8x8xbf16>
      %201 = vector.shape_cast %198 : vector<8x8xbf16> to vector<1x8x8xbf16>
      tpu.vector_store %arg7[%c0_127, %c0_128, %c24], %201 {strides = array<i32>} : memref<1x8x32xbf16, #tpu.memory_space<vmem>>, vector<1x8x8xbf16>,
    } else {
    }
    return
  }
  func.func @transform_0(%arg0: i32, %arg1: i32, %arg2: i32, %arg3: i32) -> (i32, i32, i32) {
    %c0_i32 = arith.constant 0 : i32
    return %arg0, %arg2, %arg1 : i32, i32, i32
  }
  func.func @transform_1(%arg0: i32, %arg1: i32, %arg2: i32, %arg3: i32) -> (i32, i32, i32) {
    %c0_i32 = arith.constant 0 : i32
    return %arg0, %arg3, %arg1 : i32, i32, i32
  }
  func.func @transform_2(%arg0: i32, %arg1: i32, %arg2: i32, %arg3: i32) -> (i32, i32, i32) {
    %c0_i32 = arith.constant 0 : i32
    return %arg0, %arg3, %arg1 : i32, i32, i32
  }
  func.func @transform_3(%arg0: i32, %arg1: i32, %arg2: i32, %arg3: i32) -> (i32, i32, i32) {
    %c0_i32 = arith.constant 0 : i32
    return %arg0, %arg2, %arg1 : i32, i32, i32
  }
}

module attributes {stable_mosaic.version = 11 : i64} {
  func.func @_linear_kernel(%arg0: i32, %arg1: i32, %arg2: memref<16x32xbf16, #tpu.memory_space<vmem>>, %arg3: memref<32x32xbf16, #tpu.memory_space<vmem>>, %arg4: memref<1x32xf32, #tpu.memory_space<vmem>>, %arg5: memref<16x32xf32, #tpu.memory_space<vmem>>) attributes {dimension_semantics = [#tpu.dimension_semantics<parallel>, #tpu.dimension_semantics<parallel>], iteration_bounds = array<i64: 1, 1>, scalar_prefetch = 0 : i64, scratch_operands = 0 : i64, tpu.core_type = #tpu.core_type<tc>, window_params = [{transform_indices = @transform_0, window_bounds = array<i64: 16, 32>}, {transform_indices = @transform_1, window_bounds = array<i64: 32, 32>}, {transform_indices = @transform_2, window_bounds = array<i64: 1, 32>}, {transform_indices = @transform_3, window_bounds = array<i64: 16, 32>}]} {
    %c0 = arith.constant 0 : index
    %c0_0 = arith.constant 0 : index
    %0 = vector.load %arg2[%c0, %c0_0] : memref<16x32xbf16, #tpu.memory_space<vmem>>, vector<16x32xbf16>
    %c0_1 = arith.constant 0 : index
    %c0_2 = arith.constant 0 : index
    %1 = vector.load %arg3[%c0_1, %c0_2] : memref<32x32xbf16, #tpu.memory_space<vmem>>, vector<32x32xbf16>
    %cst = arith.constant dense<0.000000e+00> : vector<16x32xf32>
    %2 = tpu.matmul %0, %1, %cst {dimension_numbers = #tpu.dot_dimension_numbers<[1], [0], [0], [1], [0, 0, 1, 1], [], []>} : vector<16x32xbf16>, vector<32x32xbf16>, vector<16x32xf32> -> vector<16x32xf32>
    %c0_3 = arith.constant 0 : index
    %c0_4 = arith.constant 0 : index
    %3 = vector.load %arg4[%c0_3, %c0_4] : memref<1x32xf32, #tpu.memory_space<vmem>>, vector<1x32xf32>
    %4 = vector.broadcast %3 : vector<1x32xf32> to vector<16x32xf32>
    %5 = arith.addf %2, %4 : vector<16x32xf32>
    %c0_5 = arith.constant 0 : index
    %c0_6 = arith.constant 0 : index
    %6 = vector.load %arg5[%c0_5, %c0_6] : memref<16x32xf32, #tpu.memory_space<vmem>>, vector<16x32xf32>
    tpu.vector_store %arg5[%c0_5, %c0_6], %5 {strides = array<i32>} : memref<16x32xf32, #tpu.memory_space<vmem>>, vector<16x32xf32>,
    return
  }
  func.func @transform_0(%arg0: i32, %arg1: i32) -> (i32, i32) {
    %c0_i32 = arith.constant 0 : i32
    %c0_i32_0 = arith.constant 0 : i32
    return %arg0, %c0_i32 : i32, i32
  }
  func.func @transform_1(%arg0: i32, %arg1: i32) -> (i32, i32) {
    %c0_i32 = arith.constant 0 : i32
    %c0_i32_0 = arith.constant 0 : i32
    return %c0_i32, %arg1 : i32, i32
  }
  func.func @transform_2(%arg0: i32, %arg1: i32) -> (i32, i32) {
    %c0_i32 = arith.constant 0 : i32
    %c0_i32_0 = arith.constant 0 : i32
    return %c0_i32, %arg1 : i32, i32
  }
  func.func @transform_3(%arg0: i32, %arg1: i32) -> (i32, i32) {
    %c0_i32 = arith.constant 0 : i32
    return %arg0, %arg1 : i32, i32
  }
}

</mosaic_0001>

<llo_original>
// kernel: multi_head_attention.9
$region0: #{multi_head_attention.9}
  #allocation0 [shape = 'u32[]', space=smem, size = 0x4, offset = 0x4, fixed_abs, tag = 'smem constant byte address 0x4 - core index']
  #allocation1 [shape = 'u32[144,128]{1,0:T(1,128)}', space=vmem, size = 0x12000, scoped, tag = 'internal scratch']
  %s0 = inlined_call_operand.vmem [shape: bf16[16,32], index: 0, kind: input, shape index: {}]
  %s1 = inlined_call_operand.vmem [shape: bf16[32,32], index: 1, kind: input, shape index: {}]
  %s2 = inlined_call_operand.vmem [shape: f32[1,32], index: 2, kind: input, shape index: {}]
  %s3 = inlined_call_operand.hbm [shape: f32[16,32], index: 3, kind: output, shape index: {}]
  %s4 = sld [smem:[#allocation0]]
  $region22: #{multi_head_attention.9} parent=0
    _
  %s6 = ssub.s32 1, %s4
  %s7 = scalar_select 0, %s6, %s4
  $region1: #{multi_head_attention.9} parent=0
    #allocation2 [shape = 'u8[8192]{0}', space=vmem, size = 0x2000, scoped, tag = 'output window, operand 0, single buffered']
    #allocation3 [shape = 's32[1]{0}', space=sflag, size = 0x4, scoped, tag = 'scoped memory for multi_head_attention.9']
    %8 = vsyncpa [#allocation3], 0
    // Predicated region
    $region2: #{multi_head_attention.9} parent=1 // pred_check
      _
    $region3: #{multi_head_attention.9} parent=1 // pred_check_branch
      %10 = sbr.rel (0) target = $region5
    $region4: #{multi_head_attention.9} parent=1 // pred_region
      _
    $region5: #{multi_head_attention.9} parent=1 // pred_fallthru
      _
    // Predicated region
    $region6: #{multi_head_attention.9} parent=1 // pred_check
      _
    $region7: #{multi_head_attention.9} parent=1 // pred_check_branch
      %12 = sbr.rel (0) target = $region9
    $region8: #{multi_head_attention.9} parent=1 // pred_region
      _
    $region9: #{multi_head_attention.9} parent=1 // pred_fallthru
      _
    // Predicated region
    $region10: #{multi_head_attention.9} parent=1 // pred_check
      _
    $region11: #{multi_head_attention.9} parent=1 // pred_check_branch
      %14 = sbr.rel (0) target = $region13
    $region12: #{multi_head_attention.9} parent=1 // pred_region
      _
    $region13: #{multi_head_attention.9} parent=1 // pred_fallthru
      _
    %v16 = vld [vmem:[%s0] sm:$0xf]
    %v17 = vld [vmem:[%s0 + $0x4] sm:$0xf]
    %v18 = vld [vmem:[%s1] sm:$0xf]
    %v19 = vld [vmem:[%s1 + $0x4] sm:$0xf]
    %v20 = vld [vmem:[%s1 + $0x8] sm:$0xf]
    %v21 = vld [vmem:[%s1 + $0xc] sm:$0xf]
    %v22 = vld [vmem:[%s2] sm:$0x1]
    %v24 = vlaneseq
    %v25 = vshrl.u32 %v24, 7
    %v26 = vsub.s32 0, %v25
    %v27 = vrot.slane %v22, %v26
    %v31 = vunpack.c.l.b16 %v16
    %v32 = vunpack.c.l.b16 %v17
    %v33 = vpack.c.b16 %v32, %v31
    %v38 = vunpack.c.l.b16 %v18
    %v39 = vunpack.c.l.b16 %v19
    %v40 = vunpack.c.l.b16 %v20
    %v41 = vunpack.c.l.b16 %v21
    %v42 = vpack.c.b16 %v39, %v38
    %v43 = vpack.c.b16 %v41, %v40
    %vm46 = vcmask 261120
    %v48 = vsel %vm46, %v33, 0
    %50 = vmatprep.subr.bf16.mxu0 0
    %51 = vmatpush1.bf16.msra.mxu0 0
    %52 = vmatprep.subr.bf16.mxu0 0
    %53 = vmatpush1.bf16.msra.mxu0 0
    %54 = vmatprep.subr.bf16.mxu0 0
    %55 = vmatpush1.bf16.msra.mxu0 0
    %56 = vmatprep.subr.bf16.mxu0 0
    %57 = vmatpush1.bf16.msra.mxu0 0
    %58 = vmatprep.subr.bf16.mxu0 0
    %59 = vmatpush1.bf16.msra.mxu0 0
    %60 = vmatprep.subr.bf16.mxu0 0
    %61 = vmatpush1.bf16.msra.mxu0 0
    %62 = vmatprep.subr.bf16.mxu0 0
    %63 = vmatpush1.bf16.msra.mxu0 %v43
    %64 = vmatprep.subr.bf16.mxu0 0
    %65 = vmatpush1.bf16.msra.mxu0 %v42
    %66 = vmatprep.subr.bf16.mxu0 0
    %67 = vmatpush2.bf16.msra.mxu0 0
    %68 = vmatprep.subr.bf16.mxu0 0
    %69 = vmatpush2.bf16.msra.mxu0 0
    %70 = vmatprep.subr.bf16.mxu0 0
    %71 = vmatpush2.bf16.msra.mxu0 0
    %72 = vmatprep.subr.bf16.mxu0 0
    %73 = vmatpush2.bf16.msra.mxu0 0
    %74 = vmatprep.subr.bf16.mxu0 0
    %75 = vmatpush2.bf16.msra.mxu0 0
    %76 = vmatprep.subr.bf16.mxu0 0
    %77 = vmatpush2.bf16.msra.mxu0 0
    %78 = vmatprep.subr.bf16.mxu0 0
    %79 = vmatpush2.bf16.msra.mxu0 0
    %80 = vmatprep.subr.bf16.mxu0 0
    %81 = vmatpush2.bf16.msra.mxu0 0
    %82 = vmatprep.mubr.bf16.mxu0 0
    %83 = vmatmul.mubr.bf16.gmra.mxu0 %v48
    %v84 = vpop.f32.mrf.mxu0
    %v85 = vadd.f32 %v27, %v84
    %v86 = vpop.f32.mrf.mxu0
    %v87 = vpop.f32.mrf.mxu0
    %v88 = vadd.f32 %v27, %v87
    %v89 = vpop.f32.mrf.mxu0
    %90 = vdwg.mxu0
    %91 = vst.msk [vmem:[#allocation2] sm:$0xff] %vm46, %v85
    %92 = vst.msk [vmem:[#allocation2 + $0x8] sm:$0xff] %vm46, %v88
    // Predicated region
    $region14: #{multi_head_attention.9} parent=1 // pred_check
      _
    $region15: #{multi_head_attention.9} parent=1 // pred_check_branch
      %94 = sbr.rel (0) target = $region17
    $region16: #{multi_head_attention.9} parent=1 // pred_region
      %s96 = ssub.s32 256, 256
      %97 = vsyncadd [#allocation3], %s96
      %s98 = sshll.u32 [#allocation2], 4
      %s99 = int_to_ptr.vmem [resolvable:$true] %s98
      %104 = dma.vmem_to_hbm [thread:$0]  %s99, 256, %s3, [#allocation3], 128, 128, 8
    $region17: #{multi_head_attention.9} parent=1 // pred_fallthru
      _
    // Predicated region
    $region18: #{multi_head_attention.9} parent=1 // pred_check
      _
    $region19: #{multi_head_attention.9} parent=1 // pred_check_branch
      %106 = sbr.rel (0) target = $region21
    $region20: #{multi_head_attention.9} parent=1 // pred_region
      %107 = dma.done [#allocation3], 256
    $region21: #{multi_head_attention.9} parent=1 // pred_fallthru
      _
    %108 = vsyncpa [#allocation3], 1

// kernel: multi_head_attention.5
$region0: #{multi_head_attention.5}
  #allocation0 [shape = 'u32[]', space=smem, size = 0x4, offset = 0x4, fixed_abs, tag = 'smem constant byte address 0x4 - core index']
  #allocation1 [shape = 'u32[144,128]{1,0:T(1,128)}', space=vmem, size = 0x12000, scoped, tag = 'internal scratch']
  %s0 = inlined_call_operand.hbm [shape: f32[16,32], index: 0, kind: input, shape index: {}]
  %s1 = inlined_call_operand.vmem [shape: bf16[32,32], index: 1, kind: input, shape index: {}]
  %s2 = inlined_call_operand.vmem [shape: f32[1,32], index: 2, kind: input, shape index: {}]
  %s3 = inlined_call_operand.vmem [shape: bf16[16,32], index: 3, kind: output, shape index: {}]
  %s4 = sld [smem:[#allocation0]]
  $region26: #{multi_head_attention.5} parent=0
    _
  %s6 = ssub.s32 1, %s4
  %s7 = scalar_select 0, %s6, %s4
  $region1: #{multi_head_attention.5} parent=0
    #allocation2 [shape = 'u8[8192]{0}', space=vmem, size = 0x2000, scoped, tag = 'input window, operand 0, single buffered']
    #allocation3 [shape = 's32[1]{0}', space=sflag, size = 0x4, scoped, tag = 'scoped memory for multi_head_attention.5']
    %8 = vsyncpa [#allocation3], 0
    // Predicated region
    $region2: #{multi_head_attention.5} parent=1 // pred_check
      _
    $region3: #{multi_head_attention.5} parent=1 // pred_check_branch
      %10 = sbr.rel (0) target = $region5
    $region4: #{multi_head_attention.5} parent=1 // pred_region
      %s12 = ssub.s32 256, 256
      %13 = vsyncadd [#allocation3], %s12
      %s14 = sshll.u32 [#allocation2], 4
      %s15 = int_to_ptr.vmem [resolvable:$true] %s14
      %20 = dma.hbm_to_vmem [thread:$0]  %s0, 256, %s15, [#allocation3], 128, 128, 8
    $region5: #{multi_head_attention.5} parent=1 // pred_fallthru
      _
    // Predicated region
    $region6: #{multi_head_attention.5} parent=1 // pred_check
      _
    $region7: #{multi_head_attention.5} parent=1 // pred_check_branch
      %22 = sbr.rel (0) target = $region9
    $region8: #{multi_head_attention.5} parent=1 // pred_region
      _
    $region9: #{multi_head_attention.5} parent=1 // pred_fallthru
      _
    // Predicated region
    $region10: #{multi_head_attention.5} parent=1 // pred_check
      _
    $region11: #{multi_head_attention.5} parent=1 // pred_check_branch
      %24 = sbr.rel (0) target = $region13
    $region12: #{multi_head_attention.5} parent=1 // pred_region
      _
    $region13: #{multi_head_attention.5} parent=1 // pred_fallthru
      _
    // Predicated region
    $region14: #{multi_head_attention.5} parent=1 // pred_check
      _
    $region15: #{multi_head_attention.5} parent=1 // pred_check_branch
      %26 = sbr.rel (0) target = $region17
    $region16: #{multi_head_attention.5} parent=1 // pred_region
      %27 = dma.done [#allocation3], 256
    $region17: #{multi_head_attention.5} parent=1 // pred_fallthru
      _
    %v29 = vld [vmem:[#allocation2] sm:$0xff]
    %v30 = vld [vmem:[#allocation2 + $0x8] sm:$0xff]
    %v31 = vpack.c.bf16 %v30, %v29
    %v32 = vld [vmem:[%s1] sm:$0xf]
    %v33 = vld [vmem:[%s1 + $0x4] sm:$0xf]
    %v34 = vld [vmem:[%s1 + $0x8] sm:$0xf]
    %v35 = vld [vmem:[%s1 + $0xc] sm:$0xf]
    %v36 = vld [vmem:[%s2] sm:$0x1]
    %v38 = vlaneseq
    %v39 = vshrl.u32 %v38, 7
    %v40 = vsub.s32 0, %v39
    %v41 = vrot.slane %v36, %v40
    %v47 = vunpack.c.l.b16 %v32
    %v48 = vunpack.c.l.b16 %v33
    %v49 = vunpack.c.l.b16 %v34
    %v50 = vunpack.c.l.b16 %v35
    %v51 = vpack.c.b16 %v48, %v47
    %v52 = vpack.c.b16 %v50, %v49
    %vm55 = vcmask 261120
    %v57 = vsel %vm55, %v31, 0
    %59 = vmatprep.subr.bf16.mxu0 0
    %60 = vmatpush1.bf16.msra.mxu0 0
    %61 = vmatprep.subr.bf16.mxu0 0
    %62 = vmatpush1.bf16.msra.mxu0 0
    %63 = vmatprep.subr.bf16.mxu0 0
    %64 = vmatpush1.bf16.msra.mxu0 0
    %65 = vmatprep.subr.bf16.mxu0 0
    %66 = vmatpush1.bf16.msra.mxu0 0
    %67 = vmatprep.subr.bf16.mxu0 0
    %68 = vmatpush1.bf16.msra.mxu0 0
    %69 = vmatprep.subr.bf16.mxu0 0
    %70 = vmatpush1.bf16.msra.mxu0 0
    %71 = vmatprep.subr.bf16.mxu0 0
    %72 = vmatpush1.bf16.msra.mxu0 %v52
    %73 = vmatprep.subr.bf16.mxu0 0
    %74 = vmatpush1.bf16.msra.mxu0 %v51
    %75 = vmatprep.subr.bf16.mxu0 0
    %76 = vmatpush2.bf16.msra.mxu0 0
    %77 = vmatprep.subr.bf16.mxu0 0
    %78 = vmatpush2.bf16.msra.mxu0 0
    %79 = vmatprep.subr.bf16.mxu0 0
    %80 = vmatpush2.bf16.msra.mxu0 0
    %81 = vmatprep.subr.bf16.mxu0 0
    %82 = vmatpush2.bf16.msra.mxu0 0
    %83 = vmatprep.subr.bf16.mxu0 0
    %84 = vmatpush2.bf16.msra.mxu0 0
    %85 = vmatprep.subr.bf16.mxu0 0
    %86 = vmatpush2.bf16.msra.mxu0 0
    %87 = vmatprep.subr.bf16.mxu0 0
    %88 = vmatpush2.bf16.msra.mxu0 0
    %89 = vmatprep.subr.bf16.mxu0 0
    %90 = vmatpush2.bf16.msra.mxu0 0
    %91 = vmatprep.mubr.bf16.mxu0 0
    %92 = vmatmul.mubr.bf16.gmra.mxu0 %v57
    %v93 = vpop.f32.mrf.mxu0
    %v94 = vadd.f32 %v41, %v93
    %v95 = vpop.f32.mrf.mxu0
    %v96 = vpop.f32.mrf.mxu0
    %v97 = vadd.f32 %v41, %v96
    %v98 = vpop.f32.mrf.mxu0
    %99 = vdwg.mxu0
    %v100 = vpack.c.bf16 %v97, %v94
    %v102 = vunpack.c.l.b16 %v100
    %v103 = vunpack.c.h.b16 %v100
    %v104 = vpack.c.b16 %v102, %v102
    %v105 = vpack.c.b16 %v103, %v103
    %vm108 = vcmask 257024
    %109 = vst.msk [vmem:[%s3] sm:$0xf] %vm108, %v104
    %110 = vst.msk [vmem:[%s3 + $0x4] sm:$0xf] %vm108, %v105
    // Predicated region
    $region18: #{multi_head_attention.5} parent=1 // pred_check
      _
    $region19: #{multi_head_attention.5} parent=1 // pred_check_branch
      %112 = sbr.rel (0) target = $region21
    $region20: #{multi_head_attention.5} parent=1 // pred_region
      _
    $region21: #{multi_head_attention.5} parent=1 // pred_fallthru
      _
    // Predicated region
    $region22: #{multi_head_attention.5} parent=1 // pred_check
      _
    $region23: #{multi_head_attention.5} parent=1 // pred_check_branch
      %114 = sbr.rel (0) target = $region25
    $region24: #{multi_head_attention.5} parent=1 // pred_region
      _
    $region25: #{multi_head_attention.5} parent=1 // pred_fallthru
      _
    %115 = vsyncpa [#allocation3], 1

// kernel: multi_head_attention.6
$region0: #{multi_head_attention.6}
  #allocation0 [shape = 'u32[]', space=smem, size = 0x4, offset = 0x4, fixed_abs, tag = 'smem constant byte address 0x4 - core index']
  #allocation1 [shape = 'u32[144,128]{1,0:T(1,128)}', space=vmem, size = 0x12000, scoped, tag = 'internal scratch']
  %s0 = inlined_call_operand.vmem [shape: f32[16,32], index: 0, kind: input, shape index: {}]
  %s1 = inlined_call_operand.vmem [shape: bf16[32,32], index: 1, kind: input, shape index: {}]
  %s2 = inlined_call_operand.vmem [shape: f32[1,32], index: 2, kind: input, shape index: {}]
  %s3 = inlined_call_operand.vmem [shape: bf16[16,32], index: 3, kind: output, shape index: {}]
  %s4 = sld [smem:[#allocation0]]
  $region22: #{multi_head_attention.6} parent=0
    _
  %s6 = ssub.s32 1, %s4
  %s7 = scalar_select 0, %s6, %s4
  // Predicated region
  $region2: #{multi_head_attention.6} parent=0 // pred_check
    _
  $region3: #{multi_head_attention.6} parent=0 // pred_check_branch
    %9 = sbr.rel (0) target = $region5
  $region4: #{multi_head_attention.6} parent=0 // pred_region
    _
  $region5: #{multi_head_attention.6} parent=0 // pred_fallthru
    _
  // Predicated region
  $region6: #{multi_head_attention.6} parent=0 // pred_check
    _
  $region7: #{multi_head_attention.6} parent=0 // pred_check_branch
    %11 = sbr.rel (0) target = $region9
  $region8: #{multi_head_attention.6} parent=0 // pred_region
    _
  $region9: #{multi_head_attention.6} parent=0 // pred_fallthru
    _
  // Predicated region
  $region10: #{multi_head_attention.6} parent=0 // pred_check
    _
  $region11: #{multi_head_attention.6} parent=0 // pred_check_branch
    %13 = sbr.rel (0) target = $region13
  $region12: #{multi_head_attention.6} parent=0 // pred_region
    _
  $region13: #{multi_head_attention.6} parent=0 // pred_fallthru
    _
  %v15 = vld [vmem:[%s0] sm:$0xff]
  %v16 = vld [vmem:[%s0 + $0x8] sm:$0xff]
  %v17 = vpack.c.bf16 %v16, %v15
  %v18 = vld [vmem:[%s1] sm:$0xf]
  %v19 = vld [vmem:[%s1 + $0x4] sm:$0xf]
  %v20 = vld [vmem:[%s1 + $0x8] sm:$0xf]
  %v21 = vld [vmem:[%s1 + $0xc] sm:$0xf]
  %v22 = vld [vmem:[%s2] sm:$0x1]
  %v24 = vlaneseq
  %v25 = vshrl.u32 %v24, 7
  %v26 = vsub.s32 0, %v25
  %v27 = vrot.slane %v22, %v26
  %v33 = vunpack.c.l.b16 %v18
  %v34 = vunpack.c.l.b16 %v19
  %v35 = vunpack.c.l.b16 %v20
  %v36 = vunpack.c.l.b16 %v21
  %v37 = vpack.c.b16 %v34, %v33
  %v38 = vpack.c.b16 %v36, %v35
  %vm41 = vcmask 261120
  %v43 = vsel %vm41, %v17, 0
  %45 = vmatprep.subr.bf16.mxu0 0
  %46 = vmatpush1.bf16.msra.mxu0 0
  %47 = vmatprep.subr.bf16.mxu0 0
  %48 = vmatpush1.bf16.msra.mxu0 0
  %49 = vmatprep.subr.bf16.mxu0 0
  %50 = vmatpush1.bf16.msra.mxu0 0
  %51 = vmatprep.subr.bf16.mxu0 0
  %52 = vmatpush1.bf16.msra.mxu0 0
  %53 = vmatprep.subr.bf16.mxu0 0
  %54 = vmatpush1.bf16.msra.mxu0 0
  %55 = vmatprep.subr.bf16.mxu0 0
  %56 = vmatpush1.bf16.msra.mxu0 0
  %57 = vmatprep.subr.bf16.mxu0 0
  %58 = vmatpush1.bf16.msra.mxu0 %v38
  %59 = vmatprep.subr.bf16.mxu0 0
  %60 = vmatpush1.bf16.msra.mxu0 %v37
  %61 = vmatprep.subr.bf16.mxu0 0
  %62 = vmatpush2.bf16.msra.mxu0 0
  %63 = vmatprep.subr.bf16.mxu0 0
  %64 = vmatpush2.bf16.msra.mxu0 0
  %65 = vmatprep.subr.bf16.mxu0 0
  %66 = vmatpush2.bf16.msra.mxu0 0
  %67 = vmatprep.subr.bf16.mxu0 0
  %68 = vmatpush2.bf16.msra.mxu0 0
  %69 = vmatprep.subr.bf16.mxu0 0
  %70 = vmatpush2.bf16.msra.mxu0 0
  %71 = vmatprep.subr.bf16.mxu0 0
  %72 = vmatpush2.bf16.msra.mxu0 0
  %73 = vmatprep.subr.bf16.mxu0 0
  %74 = vmatpush2.bf16.msra.mxu0 0
  %75 = vmatprep.subr.bf16.mxu0 0
  %76 = vmatpush2.bf16.msra.mxu0 0
  %77 = vmatprep.mubr.bf16.mxu0 0
  %78 = vmatmul.mubr.bf16.gmra.mxu0 %v43
  %v79 = vpop.f32.mrf.mxu0
  %v80 = vadd.f32 %v27, %v79
  %v81 = vpop.f32.mrf.mxu0
  %v82 = vpop.f32.mrf.mxu0
  %v83 = vadd.f32 %v27, %v82
  %v84 = vpop.f32.mrf.mxu0
  %85 = vdwg.mxu0
  %v86 = vpack.c.bf16 %v83, %v80
  %v88 = vunpack.c.l.b16 %v86
  %v89 = vunpack.c.h.b16 %v86
  %v90 = vpack.c.b16 %v88, %v88
  %v91 = vpack.c.b16 %v89, %v89
  %vm94 = vcmask 257024
  %95 = vst.msk [vmem:[%s3] sm:$0xf] %vm94, %v90
  %96 = vst.msk [vmem:[%s3 + $0x4] sm:$0xf] %vm94, %v91
  // Predicated region
  $region14: #{multi_head_attention.6} parent=0 // pred_check
    _
  $region15: #{multi_head_attention.6} parent=0 // pred_check_branch
    %98 = sbr.rel (0) target = $region17
  $region16: #{multi_head_attention.6} parent=0 // pred_region
    _
  $region17: #{multi_head_attention.6} parent=0 // pred_fallthru
    _
  // Predicated region
  $region18: #{multi_head_attention.6} parent=0 // pred_check
    _
  $region19: #{multi_head_attention.6} parent=0 // pred_check_branch
    %100 = sbr.rel (0) target = $region21
  $region20: #{multi_head_attention.6} parent=0 // pred_region
    _
  $region21: #{multi_head_attention.6} parent=0 // pred_fallthru
    _

// kernel: multi_head_attention.8
$region0: #{multi_head_attention.8}
  #allocation0 [shape = 'u32[]', space=smem, size = 0x4, offset = 0x4, fixed_abs, tag = 'smem constant byte address 0x4 - core index']
  #allocation1 [shape = 'u32[144,128]{1,0:T(1,128)}', space=vmem, size = 0x12000, scoped, tag = 'internal scratch']
  #allocation2 [shape = 'f32[4,8,1]{2,1,0:T(8,128)}', space=vmem, size = 0x4000, scoped, tag = 'scratch operand']
  #allocation3 [shape = 'f32[4,8,1]{2,1,0:T(8,128)}', space=vmem, size = 0x4000, scoped, tag = 'scratch operand']
  #allocation4 [shape = 'f32[4,8,8]{2,1,0:T(8,128)}', space=vmem, size = 0x4000, scoped, tag = 'scratch operand']
  %s0 = inlined_call_operand.vmem [shape: bf16[2,8,32], index: 0, kind: input, shape index: {}]
  %s1 = inlined_call_operand.vmem [shape: bf16[2,8,32], index: 1, kind: input, shape index: {}]
  %s2 = inlined_call_operand.vmem [shape: bf16[2,8,32], index: 2, kind: input, shape index: {}]
  %s3 = inlined_call_operand.vmem [shape: bf16[2,8,32], index: 3, kind: output, shape index: {}]
  %s4 = sld [smem:[#allocation0]]
  $region53: #{multi_head_attention.8} parent=0
    _
  %s6 = ssub.s32 1, %s4
  %s7 = scalar_select 0, %s6, %s4
  loop: start=0, step=1, limit=4
  $region2: #{multi_head_attention.8} parent=0 // loop_pre_header
    _
  $region3: #{multi_head_attention.8} parent=0 // loop_header
    %s9 = sphi 0, %s13
    %p10 = scmp.ge.s32.totalorder %s9, 4
    %s16 = sphi 0, %s42
    %s17 = sphi 0, %s38
    %s18 = sphi 0, %s34
    %s19 = sphi 0, %s30
    %s20 = sphi 0, %s16
    %s21 = sphi 0, %s17
    %s22 = sphi 0, %s18
    %s23 = sphi 0, %s19
    %s24 = sphi 0, %s20
    %s25 = sphi 0, %s21
    %s26 = sphi 0, %s22
    %s27 = sphi 0, %s23
    %s49 = sphi 0, %s51
    %s52 = sphi 0, %s49
    %s53 = sphi 0, %s52
    %s69 = sphi 0, %s53
    %s79 = sphi 0, %s81
    %s82 = sphi 0, %s79
    %s83 = sphi 0, %s82
    %s99 = sphi 0, %s83
    %s109 = sphi 0, %s111
    %s112 = sphi 0, %s109
    %s113 = sphi 0, %s112
    %s129 = sphi 0, %s113
    %s139 = sphi 0, %s141
    %s142 = sphi 0, %s139
    %s143 = sphi 0, %s142
    %s159 = sphi 0, %s143
  $region4: #{multi_head_attention.8} parent=0 // loop_header_branch
    %12 = sbr.rel (%p10) target = $region8
  $region5: #{multi_head_attention.8} parent=0 // loop_body
    %s14 = ssub.s32 %s9, 1
    %s15 = ssub.s32 %s9, 2
    %s28 = sadd.s32 1, %s19
    %p29 = scmp.ge.s32.totalorder %s28, 1
    %s30 = scalar_select %p29, 0, %s28
    %s31 = sadd.s32 1, %s18
    %s32 = scalar_select %p29, %s31, %s18
    %p33 = scmp.ge.s32.totalorder %s32, 1
    %s34 = scalar_select %p33, 0, %s32
    %s35 = sadd.s32 1, %s17
    %s36 = scalar_select %p33, %s35, %s17
    %p37 = scmp.ge.s32.totalorder %s36, 1
    %s38 = scalar_select %p37, 0, %s36
    %s39 = sadd.s32 1, %s16
    %s40 = scalar_select %p37, %s39, %s16
    %p41 = scmp.ge.s32.totalorder %s40, 2
    %s42 = scalar_select %p41, 0, %s40
    %s43 = ssub.s32 %s16, %s42
    %s44 = ssub.s32 %s18, %s34
    %s45 = sor.u32 %s43, %s44
    %s46 = ssub.s32 %s17, %s38
    %s47 = sor.u32 %s45, %s46
    %p48 = scmp.eq.s32.totalorder %s47, 0
    %s50 = sadd.s32 %s49, 1
    %s51 = scalar_select %p48, %s49, %s50
    %p54 = pneg %p48
    %p55 = scmp.eq.s32.totalorder %s9, 1
    %p56 = por %p54, %p55
    %p57 = scmp.ne.s32.totalorder %s49, %s52
    %p58 = scmp.eq.s32.totalorder %s9, 0
    %p59 = por %p57, %p58
    %p60 = scmp.ne.s32.totalorder %s49, %s52
    %p61 = scmp.eq.s32.totalorder %s14, 1
    %p62 = por %p60, %p61
    %p63 = scmp.ne.s32.totalorder %s52, %s53
    %p64 = scmp.eq.s32.totalorder %s14, 0
    %p65 = por %p63, %p64
    %p66 = scmp.ne.s32.totalorder %s52, %s53
    %p67 = scmp.eq.s32.totalorder %s15, 1
    %p68 = por %p66, %p67
    %p70 = scmp.ne.s32.totalorder %s53, %s69
    %p71 = scmp.eq.s32.totalorder %s15, 0
    %p72 = por %p70, %p71
    %s73 = ssub.s32 %s16, %s42
    %s74 = ssub.s32 %s19, %s30
    %s75 = sor.u32 %s73, %s74
    %s76 = ssub.s32 %s17, %s38
    %s77 = sor.u32 %s75, %s76
    %p78 = scmp.eq.s32.totalorder %s77, 0
    %s80 = sadd.s32 %s79, 1
    %s81 = scalar_select %p78, %s79, %s80
    %p84 = pneg %p78
    %p85 = scmp.eq.s32.totalorder %s9, 1
    %p86 = por %p84, %p85
    %p87 = scmp.ne.s32.totalorder %s79, %s82
    %p88 = scmp.eq.s32.totalorder %s9, 0
    %p89 = por %p87, %p88
    %p90 = scmp.ne.s32.totalorder %s79, %s82
    %p91 = scmp.eq.s32.totalorder %s14, 1
    %p92 = por %p90, %p91
    %p93 = scmp.ne.s32.totalorder %s82, %s83
    %p94 = scmp.eq.s32.totalorder %s14, 0
    %p95 = por %p93, %p94
    %p96 = scmp.ne.s32.totalorder %s82, %s83
    %p97 = scmp.eq.s32.totalorder %s15, 1
    %p98 = por %p96, %p97
    %p100 = scmp.ne.s32.totalorder %s83, %s99
    %p101 = scmp.eq.s32.totalorder %s15, 0
    %p102 = por %p100, %p101
    %s103 = ssub.s32 %s16, %s42
    %s104 = ssub.s32 %s19, %s30
    %s105 = sor.u32 %s103, %s104
    %s106 = ssub.s32 %s17, %s38
    %s107 = sor.u32 %s105, %s106
    %p108 = scmp.eq.s32.totalorder %s107, 0
    %s110 = sadd.s32 %s109, 1
    %s111 = scalar_select %p108, %s109, %s110
    %p114 = pneg %p108
    %p115 = scmp.eq.s32.totalorder %s9, 1
    %p116 = por %p114, %p115
    %p117 = scmp.ne.s32.totalorder %s109, %s112
    %p118 = scmp.eq.s32.totalorder %s9, 0
    %p119 = por %p117, %p118
    %p120 = scmp.ne.s32.totalorder %s109, %s112
    %p121 = scmp.eq.s32.totalorder %s14, 1
    %p122 = por %p120, %p121
    %p123 = scmp.ne.s32.totalorder %s112, %s113
    %p124 = scmp.eq.s32.totalorder %s14, 0
    %p125 = por %p123, %p124
    %p126 = scmp.ne.s32.totalorder %s112, %s113
    %p127 = scmp.eq.s32.totalorder %s15, 1
    %p128 = por %p126, %p127
    %p130 = scmp.ne.s32.totalorder %s113, %s129
    %p131 = scmp.eq.s32.totalorder %s15, 0
    %p132 = por %p130, %p131
    %s133 = ssub.s32 %s16, %s42
    %s134 = ssub.s32 %s18, %s34
    %s135 = sor.u32 %s133, %s134
    %s136 = ssub.s32 %s17, %s38
    %s137 = sor.u32 %s135, %s136
    %p138 = scmp.eq.s32.totalorder %s137, 0
    %s140 = sadd.s32 %s139, 1
    %s141 = scalar_select %p138, %s139, %s140
    %p144 = pneg %p138
    %p145 = scmp.eq.s32.totalorder %s9, 1
    %p146 = por %p144, %p145
    %p147 = scmp.ne.s32.totalorder %s139, %s142
    %p148 = scmp.eq.s32.totalorder %s9, 0
    %p149 = por %p147, %p148
    %p150 = scmp.ne.s32.totalorder %s139, %s142
    %p151 = scmp.eq.s32.totalorder %s14, 1
    %p152 = por %p150, %p151
    %p153 = scmp.ne.s32.totalorder %s142, %s143
    %p154 = scmp.eq.s32.totalorder %s14, 0
    %p155 = por %p153, %p154
    %p156 = scmp.ne.s32.totalorder %s142, %s143
    %p157 = scmp.eq.s32.totalorder %s15, 1
    %p158 = por %p156, %p157
    %p160 = scmp.ne.s32.totalorder %s143, %s159
    %p161 = scmp.eq.s32.totalorder %s15, 0
    %p162 = por %p160, %p161
    %p163 = scmp.le.s32.totalorder 1, %s9
    %p164 = scmp.lt.s32.totalorder %s9, 3
    %p165 = pnand %p163, %p164
    %p166 = pneg %p165
    // Predicated region
    $region9: #{multi_head_attention.8} parent=5 // pred_check
      _
    $region10: #{multi_head_attention.8} parent=5 // pred_check_branch
      %168 = sbr.rel (%p165) target = $region12
    $region11: #{multi_head_attention.8} parent=5 // pred_region
      %s169 = ssub.s32 %s9, 1
    $region12: #{multi_head_attention.8} parent=5 // pred_fallthru
      _
    %p170 = scmp.lt.s32.totalorder %s9, 2
    // Predicated region
    $region13: #{multi_head_attention.8} parent=5 // pred_check
      %p171 = pneg %p170
    $region14: #{multi_head_attention.8} parent=5 // pred_check_branch
      %173 = sbr.rel (%p171) target = $region16
    $region15: #{multi_head_attention.8} parent=5 // pred_region
      // Predicated region
      $region17: #{multi_head_attention.8} parent=15 // pred_check
        %p174 = pneg %p59
      $region18: #{multi_head_attention.8} parent=15 // pred_check_branch
        %176 = sbr.rel (%p174) target = $region20
      $region19: #{multi_head_attention.8} parent=15 // pred_region
        %p177 = scmp.lt.s32.totalorder %s16, 1
        %s178 = scalar_select %p177, %s16, 1
        %p179 = scmp.lt.s32.totalorder %s18, 0
        %s180 = scalar_select %p179, %s18, 0
        %p181 = scmp.lt.s32.totalorder %s17, 0
        %s182 = scalar_select %p181, %s17, 0
        %s183 = sadd.s32 %s182, %s180
        %s184 = sadd.s32 %s183, %s178
        %s185 = smul.addr %s184, 4
        %s186 = scalar_lea.vmem %s0, %s185
      $region20: #{multi_head_attention.8} parent=15 // pred_fallthru
        _
      // Predicated region
      $region21: #{multi_head_attention.8} parent=15 // pred_check
        %p187 = pneg %p89
      $region22: #{multi_head_attention.8} parent=15 // pred_check_branch
        %189 = sbr.rel (%p187) target = $region24
      $region23: #{multi_head_attention.8} parent=15 // pred_region
        %p190 = scmp.lt.s32.totalorder %s16, 1
        %s191 = scalar_select %p190, %s16, 1
        %p192 = scmp.lt.s32.totalorder %s19, 0
        %s193 = scalar_select %p192, %s19, 0
        %p194 = scmp.lt.s32.totalorder %s17, 0
        %s195 = scalar_select %p194, %s17, 0
        %s196 = sadd.s32 %s195, %s193
        %s197 = sadd.s32 %s196, %s191
        %s198 = smul.addr %s197, 4
        %s199 = scalar_lea.vmem %s1, %s198
      $region24: #{multi_head_attention.8} parent=15 // pred_fallthru
        _
      // Predicated region
      $region25: #{multi_head_attention.8} parent=15 // pred_check
        %p200 = pneg %p119
      $region26: #{multi_head_attention.8} parent=15 // pred_check_branch
        %202 = sbr.rel (%p200) target = $region28
      $region27: #{multi_head_attention.8} parent=15 // pred_region
        %p203 = scmp.lt.s32.totalorder %s16, 1
        %s204 = scalar_select %p203, %s16, 1
        %p205 = scmp.lt.s32.totalorder %s19, 0
        %s206 = scalar_select %p205, %s19, 0
        %p207 = scmp.lt.s32.totalorder %s17, 0
        %s208 = scalar_select %p207, %s17, 0
        %s209 = sadd.s32 %s208, %s206
        %s210 = sadd.s32 %s209, %s204
        %s211 = smul.addr %s210, 4
        %s212 = scalar_lea.vmem %s2, %s211
      $region28: #{multi_head_attention.8} parent=15 // pred_fallthru
        _
    $region16: #{multi_head_attention.8} parent=5 // pred_fallthru
      _
    %p213 = scmp.le.s32.totalorder 1, %s9
    %p214 = scmp.lt.s32.totalorder %s9, 3
    %p215 = pnand %p213, %p214
    %p216 = pneg %p215
    // Predicated region
    $region29: #{multi_head_attention.8} parent=5 // pred_check
      _
    $region30: #{multi_head_attention.8} parent=5 // pred_check_branch
      %218 = sbr.rel (%p215) target = $region32
    $region31: #{multi_head_attention.8} parent=5 // pred_region
      %s219 = ssub.s32 %s9, 1
      %p220 = scmp.lt.s32.totalorder %s20, 1
      %s221 = scalar_select %p220, %s20, 1
      %p222 = scmp.lt.s32.totalorder %s22, 0
      %s223 = scalar_select %p222, %s22, 0
      %p224 = scmp.lt.s32.totalorder %s21, 0
      %s225 = scalar_select %p224, %s21, 0
      %s226 = sadd.s32 %s225, %s223
      %s227 = sadd.s32 %s226, %s221
      %s228 = smul.addr %s227, 4
      %s229 = scalar_lea.vmem %s0, %s228
      %p230 = pneg %p65
      %p231 = pneg %p62
      %p232 = scmp.lt.s32.totalorder %s20, 1
      %s233 = scalar_select %p232, %s20, 1
      %p234 = scmp.lt.s32.totalorder %s23, 0
      %s235 = scalar_select %p234, %s23, 0
      %p236 = scmp.lt.s32.totalorder %s21, 0
      %s237 = scalar_select %p236, %s21, 0
      %s238 = sadd.s32 %s237, %s235
      %s239 = sadd.s32 %s238, %s233
      %s240 = smul.addr %s239, 4
      %s241 = scalar_lea.vmem %s1, %s240
      %p242 = pneg %p95
      %p243 = pneg %p92
      %p244 = scmp.lt.s32.totalorder %s20, 1
      %s245 = scalar_select %p244, %s20, 1
      %p246 = scmp.lt.s32.totalorder %s23, 0
      %s247 = scalar_select %p246, %s23, 0
      %p248 = scmp.lt.s32.totalorder %s21, 0
      %s249 = scalar_select %p248, %s21, 0
      %s250 = sadd.s32 %s249, %s247
      %s251 = sadd.s32 %s250, %s245
      %s252 = smul.addr %s251, 4
      %s253 = scalar_lea.vmem %s2, %s252
      %p254 = pneg %p125
      %p255 = pneg %p122
      %p256 = pneg %p155
      %p257 = pneg %p152
      %p258 = scmp.lt.s32.totalorder %s20, 1
      %s259 = scalar_select %p258, %s20, 1
      %p260 = scmp.lt.s32.totalorder %s22, 0
      %s261 = scalar_select %p260, %s22, 0
      %p262 = scmp.lt.s32.totalorder %s21, 0
      %s263 = scalar_select %p262, %s21, 0
      %s264 = sadd.s32 %s263, %s261
      %s265 = sadd.s32 %s264, %s259
      %s266 = smul.addr %s265, 4
      %s267 = scalar_lea.vmem %s3, %s266
      %p268 = scmp.lt.s32.totalorder %s20, 1
      %s269 = scalar_select %p268, %s20, 1
      %p270 = scmp.lt.s32.totalorder %s22, 0
      %s271 = scalar_select %p270, %s22, 0
      %p272 = scmp.lt.s32.totalorder %s21, 0
      %s273 = scalar_select %p272, %s21, 0
      %s274 = sadd.s32 %s273, %s271
      %s275 = sadd.s32 %s274, %s269
      %s276 = smul.addr %s275, 4
      %s277 = scalar_lea.vmem %s0, %s276
      %p278 = scmp.lt.s32.totalorder %s20, 1
      %s279 = scalar_select %p278, %s20, 1
      %p280 = scmp.lt.s32.totalorder %s23, 0
      %s281 = scalar_select %p280, %s23, 0
      %p282 = scmp.lt.s32.totalorder %s21, 0
      %s283 = scalar_select %p282, %s21, 0
      %s284 = sadd.s32 %s283, %s281
      %s285 = sadd.s32 %s284, %s279
      %s286 = smul.addr %s285, 4
      %s287 = scalar_lea.vmem %s1, %s286
      %p288 = scmp.lt.s32.totalorder %s20, 1
      %s289 = scalar_select %p288, %s20, 1
      %p290 = scmp.lt.s32.totalorder %s23, 0
      %s291 = scalar_select %p290, %s23, 0
      %p292 = scmp.lt.s32.totalorder %s21, 0
      %s293 = scalar_select %p292, %s21, 0
      %s294 = sadd.s32 %s293, %s291
      %s295 = sadd.s32 %s294, %s289
      %s296 = smul.addr %s295, 4
      %s297 = scalar_lea.vmem %s2, %s296
      %p298 = scmp.lt.s32.totalorder %s20, 1
      %s299 = scalar_select %p298, %s20, 1
      %p300 = scmp.lt.s32.totalorder %s22, 0
      %s301 = scalar_select %p300, %s22, 0
      %p302 = scmp.lt.s32.totalorder %s21, 0
      %s303 = scalar_select %p302, %s21, 0
      %s304 = sadd.s32 %s303, %s301
      %s305 = sadd.s32 %s304, %s299
      %s306 = smul.addr %s305, 4
      %s307 = scalar_lea.vmem %s3, %s306
      %p310 = scmp.eq.s32.totalorder %s23, 0
      // Predicated region
      $region33: #{multi_head_attention.8} parent=31 // pred_check
        %p311 = pneg %p310
      $region34: #{multi_head_attention.8} parent=31 // pred_check_branch
        %313 = sbr.rel (%p311) target = $region36
      $region35: #{multi_head_attention.8} parent=31 // pred_region
        %vm314 = vcmask 7168
        %315 = vst.msk [vmem:[#allocation2] sm:$0xff] %vm314, -inf
        %316 = vst.msk [vmem:[#allocation2 + $0x8] sm:$0xff] %vm314, -inf
        %317 = vst.msk [vmem:[#allocation2 + $0x10] sm:$0xff] %vm314, -inf
        %318 = vst.msk [vmem:[#allocation2 + $0x18] sm:$0xff] %vm314, -inf
        %319 = vst.msk [vmem:[#allocation3] sm:$0xff] %vm314, 0.0
        %320 = vst.msk [vmem:[#allocation3 + $0x8] sm:$0xff] %vm314, 0.0
        %321 = vst.msk [vmem:[#allocation3 + $0x10] sm:$0xff] %vm314, 0.0
        %322 = vst.msk [vmem:[#allocation3 + $0x18] sm:$0xff] %vm314, 0.0
        %vm323 = vcmask 64512
        %324 = vst.msk [vmem:[#allocation4] sm:$0xff] %vm323, 0.0
        %325 = vst.msk [vmem:[#allocation4 + $0x8] sm:$0xff] %vm323, 0.0
        %326 = vst.msk [vmem:[#allocation4 + $0x10] sm:$0xff] %vm323, 0.0
        %327 = vst.msk [vmem:[#allocation4 + $0x18] sm:$0xff] %vm323, 0.0
      $region36: #{multi_head_attention.8} parent=31 // pred_fallthru
        _
      %v328 = vld [vmem:[%s277] sm:$0xf]
      %v329 = vmul.bf16 %v328, 1052065461
      %v330 = vld [vmem:[%s287] sm:$0xf]
      %v331 = vld [vmem:[%s297] sm:$0xf]
      %vm332 = vcmask 64512
      %v334 = vsel %vm332, %v329, 0
      %v337 = vsel %vm332, %v330, 0
      %339 = vmatprep.subr.bf16.mxu0 0
      %340 = vmatpush1.bf16.xpose.msra.mxu0 0
      %341 = vmatprep.subr.bf16.mxu0 0
      %342 = vmatpush1.bf16.xpose.msra.mxu0 0
      %343 = vmatprep.subr.bf16.mxu0 0
      %344 = vmatpush1.bf16.xpose.msra.mxu0 0
      %345 = vmatprep.subr.bf16.mxu0 0
      %346 = vmatpush1.bf16.xpose.msra.mxu0 0
      %347 = vmatprep.subr.bf16.mxu0 0
      %348 = vmatpush1.bf16.xpose.msra.mxu0 0
      %349 = vmatprep.subr.bf16.mxu0 0
      %350 = vmatpush1.bf16.xpose.msra.mxu0 0
      %351 = vmatprep.subr.bf16.mxu0 0
      %352 = vmatpush1.bf16.xpose.msra.mxu0 0
      %353 = vmatprep.subr.bf16.mxu0 0
      %354 = vmatpush1.bf16.xpose.msra.mxu0 %v337
      %355 = vmatprep.subr.bf16.mxu0 0
      %356 = vmatpush2.bf16.xpose.msra.mxu0 0
      %357 = vmatprep.subr.bf16.mxu0 0
      %358 = vmatpush2.bf16.xpose.msra.mxu0 0
      %359 = vmatprep.subr.bf16.mxu0 0
      %360 = vmatpush2.bf16.xpose.msra.mxu0 0
      %361 = vmatprep.subr.bf16.mxu0 0
      %362 = vmatpush2.bf16.xpose.msra.mxu0 0
      %363 = vmatprep.subr.bf16.mxu0 0
      %364 = vmatpush2.bf16.xpose.msra.mxu0 0
      %365 = vmatprep.subr.bf16.mxu0 0
      %366 = vmatpush2.bf16.xpose.msra.mxu0 0
      %367 = vmatprep.subr.bf16.mxu0 0
      %368 = vmatpush2.bf16.xpose.msra.mxu0 0
      %369 = vmatprep.subr.bf16.mxu0 0
      %370 = vmatpush2.bf16.xpose.msra.mxu0 0
      %371 = vmatprep.mubr.bf16.mxu0 0
      %372 = vmatmul.mubr.bf16.gmra.mxu0 %v334
      %v373 = vpop.f32.mrf.mxu0
      %v374 = vadd.f32 0.0, %v373
      %v375 = vpop.f32.mrf.mxu0
      %v376 = vpop.f32.mrf.mxu0
      %v377 = vpop.f32.mrf.mxu0
      %378 = vdwg.mxu0
      %v379 = vld [vmem:[#allocation2] sm:$0xff]
      %v380 = vsel %vm332, %v374, -inf
      %381 = vmax.xlane.f32.xlu0 %v380
      %v382 = vpop.xlane.xlu0 %381
      %v383 = vmax.f32 %v379, %v382
      %v384 = vsub.f32 %v379, %v383
      %v385 = vmul.f32 %v384, 1.442695
      %v386 = vpow.pop %v385
      %388 = vset.pattern.permute.xlu0 0
      %389 = vperm.xlu0 %388, %v383
      %v390 = vpop.permute.xlu0 %389
      %v392 = vsub.f32 %v374, %v390
      %v393 = vmul.f32 %v392, 1.442695
      %v394 = vpow.pop %v393
      %v395 = vld [vmem:[#allocation3] sm:$0xff]
      %v396 = vmul.f32 %v386, %v395
      %v397 = vsel %vm332, %v394, 0.0
      %398 = vadd.xlane.f32.xlu0 %v397
      %v399 = vpop.xlane.xlu0 %398
      %v400 = vadd.f32 %v396, %v399
      %vm401 = vcmask 7168
      %402 = vst.msk [vmem:[#allocation3] sm:$0xff] %vm401, %v400
      %v403 = vld [vmem:[#allocation4] sm:$0xff]
      %405 = vset.pattern.permute.xlu0 0
      %406 = vperm.xlu0 %405, %v386
      %v407 = vpop.permute.xlu0 %406
      %v409 = vmul.f32 %v407, %v403
      %v410 = vpack.c.bf16 %v394, %v394
      %v412 = vsel %vm332, %v410, 0
      %vm414 = vcmask 1043456
      %v416 = vsel %vm414, %v331, 0
      %418 = vmatprep.subr.bf16.mxu0 0
      %419 = vmatpush1.bf16.msra.mxu0 0
      %420 = vmatprep.subr.bf16.mxu0 0
      %421 = vmatpush1.bf16.msra.mxu0 0
      %422 = vmatprep.subr.bf16.mxu0 0
      %423 = vmatpush1.bf16.msra.mxu0 0
      %424 = vmatprep.subr.bf16.mxu0 0
      %425 = vmatpush1.bf16.msra.mxu0 0
      %426 = vmatprep.subr.bf16.mxu0 0
      %427 = vmatpush1.bf16.msra.mxu0 0
      %428 = vmatprep.subr.bf16.mxu0 0
      %429 = vmatpush1.bf16.msra.mxu0 0
      %430 = vmatprep.subr.bf16.mxu0 0
      %431 = vmatpush1.bf16.msra.mxu0 0
      %432 = vmatprep.subr.bf16.mxu0 0
      %433 = vmatpush1.bf16.msra.mxu0 %v416
      %434 = vmatprep.subr.bf16.mxu0 0
      %435 = vmatpush2.bf16.msra.mxu0 0
      %436 = vmatprep.subr.bf16.mxu0 0
      %437 = vmatpush2.bf16.msra.mxu0 0
      %438 = vmatprep.subr.bf16.mxu0 0
      %439 = vmatpush2.bf16.msra.mxu0 0
      %440 = vmatprep.subr.bf16.mxu0 0
      %441 = vmatpush2.bf16.msra.mxu0 0
      %442 = vmatprep.subr.bf16.mxu0 0
      %443 = vmatpush2.bf16.msra.mxu0 0
      %444 = vmatprep.subr.bf16.mxu0 0
      %445 = vmatpush2.bf16.msra.mxu0 0
      %446 = vmatprep.subr.bf16.mxu0 0
      %447 = vmatpush2.bf16.msra.mxu0 0
      %448 = vmatprep.subr.bf16.mxu0 0
      %449 = vmatpush2.bf16.msra.mxu0 0
      %450 = vmatprep.mubr.bf16.mxu0 0
      %451 = vmatmul.mubr.bf16.gmra.mxu0 %v412
      %v452 = vpop.f32.mrf.mxu0
      %v453 = vadd.f32 0.0, %v452
      %v454 = vpop.f32.mrf.mxu0
      %v455 = vpop.f32.mrf.mxu0
      %v456 = vpop.f32.mrf.mxu0
      %457 = vdwg.mxu0
      %v458 = vadd.f32 %v409, %v453
      %459 = vst.msk [vmem:[#allocation4] sm:$0xff] %vm332, %v458
      %460 = vst.msk [vmem:[#allocation2] sm:$0xff] %vm401, %v383
      %v462 = vunpack.c.l.b16 %v329
      %v463 = vpack.c.b16 %v462, %v462
      %464 = vrot.lane.b32.xlu0 %v463, 120
      %v465 = vpop.permute.xlu0 %464
      %v467 = vunpack.c.l.b16 %v330
      %v468 = vpack.c.b16 %v467, %v467
      %469 = vrot.lane.b32.xlu0 %v468, 120
      %v470 = vpop.permute.xlu0 %469
      %v472 = vsel %vm332, %v465, 0
      %v475 = vsel %vm332, %v470, 0
      %477 = vmatprep.subr.bf16.mxu0 0
      %478 = vmatpush1.bf16.xpose.msra.mxu0 0
      %479 = vmatprep.subr.bf16.mxu0 0
      %480 = vmatpush1.bf16.xpose.msra.mxu0 0
      %481 = vmatprep.subr.bf16.mxu0 0
      %482 = vmatpush1.bf16.xpose.msra.mxu0 0
      %483 = vmatprep.subr.bf16.mxu0 0
      %484 = vmatpush1.bf16.xpose.msra.mxu0 0
      %485 = vmatprep.subr.bf16.mxu0 0
      %486 = vmatpush1.bf16.xpose.msra.mxu0 0
      %487 = vmatprep.subr.bf16.mxu0 0
      %488 = vmatpush1.bf16.xpose.msra.mxu0 0
      %489 = vmatprep.subr.bf16.mxu0 0
      %490 = vmatpush1.bf16.xpose.msra.mxu0 0
      %491 = vmatprep.subr.bf16.mxu0 0
      %492 = vmatpush1.bf16.xpose.msra.mxu0 %v475
      %493 = vmatprep.subr.bf16.mxu0 0
      %494 = vmatpush2.bf16.xpose.msra.mxu0 0
      %495 = vmatprep.subr.bf16.mxu0 0
      %496 = vmatpush2.bf16.xpose.msra.mxu0 0
      %497 = vmatprep.subr.bf16.mxu0 0
      %498 = vmatpush2.bf16.xpose.msra.mxu0 0
      %499 = vmatprep.subr.bf16.mxu0 0
      %500 = vmatpush2.bf16.xpose.msra.mxu0 0
      %501 = vmatprep.subr.bf16.mxu0 0
      %502 = vmatpush2.bf16.xpose.msra.mxu0 0
      %503 = vmatprep.subr.bf16.mxu0 0
      %504 = vmatpush2.bf16.xpose.msra.mxu0 0
      %505 = vmatprep.subr.bf16.mxu0 0
      %506 = vmatpush2.bf16.xpose.msra.mxu0 0
      %507 = vmatprep.subr.bf16.mxu0 0
      %508 = vmatpush2.bf16.xpose.msra.mxu0 0
      %509 = vmatprep.mubr.bf16.mxu0 0
      %510 = vmatmul.mubr.bf16.gmra.mxu0 %v472
      %v511 = vpop.f32.mrf.mxu0
      %v512 = vadd.f32 0.0, %v511
      %v513 = vpop.f32.mrf.mxu0
      %v514 = vpop.f32.mrf.mxu0
      %v515 = vpop.f32.mrf.mxu0
      %516 = vdwg.mxu0
      %s517 = scalar_lea.vmem [#allocation2], 8
      %v518 = vld [vmem:[%s517] sm:$0xff]
      %v519 = vsel %vm332, %v512, -inf
      %520 = vmax.xlane.f32.xlu0 %v519
      %v521 = vpop.xlane.xlu0 %520
      %v522 = vmax.f32 %v518, %v521
      %v523 = vsub.f32 %v518, %v522
      %v524 = vmul.f32 %v523, 1.442695
      %v525 = vpow.pop %v524
      %527 = vset.pattern.permute.xlu0 0
      %528 = vperm.xlu0 %527, %v522
      %v529 = vpop.permute.xlu0 %528
      %v531 = vsub.f32 %v512, %v529
      %v532 = vmul.f32 %v531, 1.442695
      %v533 = vpow.pop %v532
      %s534 = scalar_lea.vmem [#allocation3], 8
      %v535 = vld [vmem:[%s534] sm:$0xff]
      %v536 = vmul.f32 %v525, %v535
      %v537 = vsel %vm332, %v533, 0.0
      %538 = vadd.xlane.f32.xlu0 %v537
      %v539 = vpop.xlane.xlu0 %538
      %v540 = vadd.f32 %v536, %v539
      %541 = vst.msk [vmem:[%s534] sm:$0xff] %vm401, %v540
      %s542 = scalar_lea.vmem [#allocation4], 8
      %v543 = vld [vmem:[%s542] sm:$0xff]
      %545 = vset.pattern.permute.xlu0 0
      %546 = vperm.xlu0 %545, %v525
      %v547 = vpop.permute.xlu0 %546
      %v549 = vmul.f32 %v547, %v543
      %v550 = vpack.c.bf16 %v533, %v533
      %v552 = vunpack.c.l.b16 %v331
      %v553 = vpack.c.b16 %v552, %v552
      %554 = vrot.lane.b32.xlu0 %v553, 120
      %v555 = vpop.permute.xlu0 %554
      %v557 = vsel %vm332, %v550, 0
      %v560 = vsel %vm414, %v555, 0
      %562 = vmatprep.subr.bf16.mxu0 0
      %563 = vmatpush1.bf16.msra.mxu0 0
      %564 = vmatprep.subr.bf16.mxu0 0
      %565 = vmatpush1.bf16.msra.mxu0 0
      %566 = vmatprep.subr.bf16.mxu0 0
      %567 = vmatpush1.bf16.msra.mxu0 0
      %568 = vmatprep.subr.bf16.mxu0 0
      %569 = vmatpush1.bf16.msra.mxu0 0
      %570 = vmatprep.subr.bf16.mxu0 0
      %571 = vmatpush1.bf16.msra.mxu0 0
      %572 = vmatprep.subr.bf16.mxu0 0
      %573 = vmatpush1.bf16.msra.mxu0 0
      %574 = vmatprep.subr.bf16.mxu0 0
      %575 = vmatpush1.bf16.msra.mxu0 0
      %576 = vmatprep.subr.bf16.mxu0 0
      %577 = vmatpush1.bf16.msra.mxu0 %v560
      %578 = vmatprep.subr.bf16.mxu0 0
      %579 = vmatpush2.bf16.msra.mxu0 0
      %580 = vmatprep.subr.bf16.mxu0 0
      %581 = vmatpush2.bf16.msra.mxu0 0
      %582 = vmatprep.subr.bf16.mxu0 0
      %583 = vmatpush2.bf16.msra.mxu0 0
      %584 = vmatprep.subr.bf16.mxu0 0
      %585 = vmatpush2.bf16.msra.mxu0 0
      %586 = vmatprep.subr.bf16.mxu0 0
      %587 = vmatpush2.bf16.msra.mxu0 0
      %588 = vmatprep.subr.bf16.mxu0 0
      %589 = vmatpush2.bf16.msra.mxu0 0
      %590 = vmatprep.subr.bf16.mxu0 0
      %591 = vmatpush2.bf16.msra.mxu0 0
      %592 = vmatprep.subr.bf16.mxu0 0
      %593 = vmatpush2.bf16.msra.mxu0 0
      %594 = vmatprep.mubr.bf16.mxu0 0
      %595 = vmatmul.mubr.bf16.gmra.mxu0 %v557
      %v596 = vpop.f32.mrf.mxu0
      %v597 = vadd.f32 0.0, %v596
      %v598 = vpop.f32.mrf.mxu0
      %v599 = vpop.f32.mrf.mxu0
      %v600 = vpop.f32.mrf.mxu0
      %601 = vdwg.mxu0
      %v602 = vadd.f32 %v549, %v597
      %603 = vst.msk [vmem:[%s542] sm:$0xff] %vm332, %v602
      %604 = vst.msk [vmem:[%s517] sm:$0xff] %vm401, %v522
      %605 = vrot.lane.b32.xlu0 %v463, 112
      %v606 = vpop.permute.xlu0 %605
      %607 = vrot.lane.b32.xlu0 %v468, 112
      %v608 = vpop.permute.xlu0 %607
      %v610 = vsel %vm332, %v606, 0
      %v613 = vsel %vm332, %v608, 0
      %615 = vmatprep.subr.bf16.mxu0 0
      %616 = vmatpush1.bf16.xpose.msra.mxu0 0
      %617 = vmatprep.subr.bf16.mxu0 0
      %618 = vmatpush1.bf16.xpose.msra.mxu0 0
      %619 = vmatprep.subr.bf16.mxu0 0
      %620 = vmatpush1.bf16.xpose.msra.mxu0 0
      %621 = vmatprep.subr.bf16.mxu0 0
      %622 = vmatpush1.bf16.xpose.msra.mxu0 0
      %623 = vmatprep.subr.bf16.mxu0 0
      %624 = vmatpush1.bf16.xpose.msra.mxu0 0
      %625 = vmatprep.subr.bf16.mxu0 0
      %626 = vmatpush1.bf16.xpose.msra.mxu0 0
      %627 = vmatprep.subr.bf16.mxu0 0
      %628 = vmatpush1.bf16.xpose.msra.mxu0 0
      %629 = vmatprep.subr.bf16.mxu0 0
      %630 = vmatpush1.bf16.xpose.msra.mxu0 %v613
      %631 = vmatprep.subr.bf16.mxu0 0
      %632 = vmatpush2.bf16.xpose.msra.mxu0 0
      %633 = vmatprep.subr.bf16.mxu0 0
      %634 = vmatpush2.bf16.xpose.msra.mxu0 0
      %635 = vmatprep.subr.bf16.mxu0 0
      %636 = vmatpush2.bf16.xpose.msra.mxu0 0
      %637 = vmatprep.subr.bf16.mxu0 0
      %638 = vmatpush2.bf16.xpose.msra.mxu0 0
      %639 = vmatprep.subr.bf16.mxu0 0
      %640 = vmatpush2.bf16.xpose.msra.mxu0 0
      %641 = vmatprep.subr.bf16.mxu0 0
      %642 = vmatpush2.bf16.xpose.msra.mxu0 0
      %643 = vmatprep.subr.bf16.mxu0 0
      %644 = vmatpush2.bf16.xpose.msra.mxu0 0
      %645 = vmatprep.subr.bf16.mxu0 0
      %646 = vmatpush2.bf16.xpose.msra.mxu0 0
      %647 = vmatprep.mubr.bf16.mxu0 0
      %648 = vmatmul.mubr.bf16.gmra.mxu0 %v610
      %v649 = vpop.f32.mrf.mxu0
      %v650 = vadd.f32 0.0, %v649
      %v651 = vpop.f32.mrf.mxu0
      %v652 = vpop.f32.mrf.mxu0
      %v653 = vpop.f32.mrf.mxu0
      %654 = vdwg.mxu0
      %s655 = scalar_lea.vmem [#allocation2], 16
      %v656 = vld [vmem:[%s655] sm:$0xff]
      %v657 = vsel %vm332, %v650, -inf
      %658 = vmax.xlane.f32.xlu0 %v657
      %v659 = vpop.xlane.xlu0 %658
      %v660 = vmax.f32 %v656, %v659
      %v661 = vsub.f32 %v656, %v660
      %v662 = vmul.f32 %v661, 1.442695
      %v663 = vpow.pop %v662
      %665 = vset.pattern.permute.xlu0 0
      %666 = vperm.xlu0 %665, %v660
      %v667 = vpop.permute.xlu0 %666
      %v669 = vsub.f32 %v650, %v667
      %v670 = vmul.f32 %v669, 1.442695
      %v671 = vpow.pop %v670
      %s672 = scalar_lea.vmem [#allocation3], 16
      %v673 = vld [vmem:[%s672] sm:$0xff]
      %v674 = vmul.f32 %v663, %v673
      %v675 = vsel %vm332, %v671, 0.0
      %676 = vadd.xlane.f32.xlu0 %v675
      %v677 = vpop.xlane.xlu0 %676
      %v678 = vadd.f32 %v674, %v677
      %679 = vst.msk [vmem:[%s672] sm:$0xff] %vm401, %v678
      %s680 = scalar_lea.vmem [#allocation4], 16
      %v681 = vld [vmem:[%s680] sm:$0xff]
      %683 = vset.pattern.permute.xlu0 0
      %684 = vperm.xlu0 %683, %v663
      %v685 = vpop.permute.xlu0 %684
      %v687 = vmul.f32 %v685, %v681
      %v688 = vpack.c.bf16 %v671, %v671
      %689 = vrot.lane.b32.xlu0 %v553, 112
      %v690 = vpop.permute.xlu0 %689
      %v692 = vsel %vm332, %v688, 0
      %v695 = vsel %vm414, %v690, 0
      %697 = vmatprep.subr.bf16.mxu0 0
      %698 = vmatpush1.bf16.msra.mxu0 0
      %699 = vmatprep.subr.bf16.mxu0 0
      %700 = vmatpush1.bf16.msra.mxu0 0
      %701 = vmatprep.subr.bf16.mxu0 0
      %702 = vmatpush1.bf16.msra.mxu0 0
      %703 = vmatprep.subr.bf16.mxu0 0
      %704 = vmatpush1.bf16.msra.mxu0 0
      %705 = vmatprep.subr.bf16.mxu0 0
      %706 = vmatpush1.bf16.msra.mxu0 0
      %707 = vmatprep.subr.bf16.mxu0 0
      %708 = vmatpush1.bf16.msra.mxu0 0
      %709 = vmatprep.subr.bf16.mxu0 0
      %710 = vmatpush1.bf16.msra.mxu0 0
      %711 = vmatprep.subr.bf16.mxu0 0
      %712 = vmatpush1.bf16.msra.mxu0 %v695
      %713 = vmatprep.subr.bf16.mxu0 0
      %714 = vmatpush2.bf16.msra.mxu0 0
      %715 = vmatprep.subr.bf16.mxu0 0
      %716 = vmatpush2.bf16.msra.mxu0 0
      %717 = vmatprep.subr.bf16.mxu0 0
      %718 = vmatpush2.bf16.msra.mxu0 0
      %719 = vmatprep.subr.bf16.mxu0 0
      %720 = vmatpush2.bf16.msra.mxu0 0
      %721 = vmatprep.subr.bf16.mxu0 0
      %722 = vmatpush2.bf16.msra.mxu0 0
      %723 = vmatprep.subr.bf16.mxu0 0
      %724 = vmatpush2.bf16.msra.mxu0 0
      %725 = vmatprep.subr.bf16.mxu0 0
      %726 = vmatpush2.bf16.msra.mxu0 0
      %727 = vmatprep.subr.bf16.mxu0 0
      %728 = vmatpush2.bf16.msra.mxu0 0
      %729 = vmatprep.mubr.bf16.mxu0 0
      %730 = vmatmul.mubr.bf16.gmra.mxu0 %v692
      %v731 = vpop.f32.mrf.mxu0
      %v732 = vadd.f32 0.0, %v731
      %v733 = vpop.f32.mrf.mxu0
      %v734 = vpop.f32.mrf.mxu0
      %v735 = vpop.f32.mrf.mxu0
      %736 = vdwg.mxu0
      %v737 = vadd.f32 %v687, %v732
      %738 = vst.msk [vmem:[%s680] sm:$0xff] %vm332, %v737
      %739 = vst.msk [vmem:[%s655] sm:$0xff] %vm401, %v660
      %740 = vrot.lane.b32.xlu0 %v463, 104
      %v741 = vpop.permute.xlu0 %740
      %742 = vrot.lane.b32.xlu0 %v468, 104
      %v743 = vpop.permute.xlu0 %742
      %v745 = vsel %vm332, %v741, 0
      %v748 = vsel %vm332, %v743, 0
      %750 = vmatprep.subr.bf16.mxu0 0
      %751 = vmatpush1.bf16.xpose.msra.mxu0 0
      %752 = vmatprep.subr.bf16.mxu0 0
      %753 = vmatpush1.bf16.xpose.msra.mxu0 0
      %754 = vmatprep.subr.bf16.mxu0 0
      %755 = vmatpush1.bf16.xpose.msra.mxu0 0
      %756 = vmatprep.subr.bf16.mxu0 0
      %757 = vmatpush1.bf16.xpose.msra.mxu0 0
      %758 = vmatprep.subr.bf16.mxu0 0
      %759 = vmatpush1.bf16.xpose.msra.mxu0 0
      %760 = vmatprep.subr.bf16.mxu0 0
      %761 = vmatpush1.bf16.xpose.msra.mxu0 0
      %762 = vmatprep.subr.bf16.mxu0 0
      %763 = vmatpush1.bf16.xpose.msra.mxu0 0
      %764 = vmatprep.subr.bf16.mxu0 0
      %765 = vmatpush1.bf16.xpose.msra.mxu0 %v748
      %766 = vmatprep.subr.bf16.mxu0 0
      %767 = vmatpush2.bf16.xpose.msra.mxu0 0
      %768 = vmatprep.subr.bf16.mxu0 0
      %769 = vmatpush2.bf16.xpose.msra.mxu0 0
      %770 = vmatprep.subr.bf16.mxu0 0
      %771 = vmatpush2.bf16.xpose.msra.mxu0 0
      %772 = vmatprep.subr.bf16.mxu0 0
      %773 = vmatpush2.bf16.xpose.msra.mxu0 0
      %774 = vmatprep.subr.bf16.mxu0 0
      %775 = vmatpush2.bf16.xpose.msra.mxu0 0
      %776 = vmatprep.subr.bf16.mxu0 0
      %777 = vmatpush2.bf16.xpose.msra.mxu0 0
      %778 = vmatprep.subr.bf16.mxu0 0
      %779 = vmatpush2.bf16.xpose.msra.mxu0 0
      %780 = vmatprep.subr.bf16.mxu0 0
      %781 = vmatpush2.bf16.xpose.msra.mxu0 0
      %782 = vmatprep.mubr.bf16.mxu0 0
      %783 = vmatmul.mubr.bf16.gmra.mxu0 %v745
      %v784 = vpop.f32.mrf.mxu0
      %v785 = vadd.f32 0.0, %v784
      %v786 = vpop.f32.mrf.mxu0
      %v787 = vpop.f32.mrf.mxu0
      %v788 = vpop.f32.mrf.mxu0
      %789 = vdwg.mxu0
      %s790 = scalar_lea.vmem [#allocation2], 24
      %v791 = vld [vmem:[%s790] sm:$0xff]
      %v792 = vsel %vm332, %v785, -inf
      %793 = vmax.xlane.f32.xlu0 %v792
      %v794 = vpop.xlane.xlu0 %793
      %v795 = vmax.f32 %v791, %v794
      %v796 = vsub.f32 %v791, %v795
      %v797 = vmul.f32 %v796, 1.442695
      %v798 = vpow.pop %v797
      %800 = vset.pattern.permute.xlu0 0
      %801 = vperm.xlu0 %800, %v795
      %v802 = vpop.permute.xlu0 %801
      %v804 = vsub.f32 %v785, %v802
      %v805 = vmul.f32 %v804, 1.442695
      %v806 = vpow.pop %v805
      %s807 = scalar_lea.vmem [#allocation3], 24
      %v808 = vld [vmem:[%s807] sm:$0xff]
      %v809 = vmul.f32 %v798, %v808
      %v810 = vsel %vm332, %v806, 0.0
      %811 = vadd.xlane.f32.xlu0 %v810
      %v812 = vpop.xlane.xlu0 %811
      %v813 = vadd.f32 %v809, %v812
      %814 = vst.msk [vmem:[%s807] sm:$0xff] %vm401, %v813
      %s815 = scalar_lea.vmem [#allocation4], 24
      %v816 = vld [vmem:[%s815] sm:$0xff]
      %818 = vset.pattern.permute.xlu0 0
      %819 = vperm.xlu0 %818, %v798
      %v820 = vpop.permute.xlu0 %819
      %v822 = vmul.f32 %v820, %v816
      %v823 = vpack.c.bf16 %v806, %v806
      %824 = vrot.lane.b32.xlu0 %v553, 104
      %v825 = vpop.permute.xlu0 %824
      %v827 = vsel %vm332, %v823, 0
      %v830 = vsel %vm414, %v825, 0
      %832 = vmatprep.subr.bf16.mxu0 0
      %833 = vmatpush1.bf16.msra.mxu0 0
      %834 = vmatprep.subr.bf16.mxu0 0
      %835 = vmatpush1.bf16.msra.mxu0 0
      %836 = vmatprep.subr.bf16.mxu0 0
      %837 = vmatpush1.bf16.msra.mxu0 0
      %838 = vmatprep.subr.bf16.mxu0 0
      %839 = vmatpush1.bf16.msra.mxu0 0
      %840 = vmatprep.subr.bf16.mxu0 0
      %841 = vmatpush1.bf16.msra.mxu0 0
      %842 = vmatprep.subr.bf16.mxu0 0
      %843 = vmatpush1.bf16.msra.mxu0 0
      %844 = vmatprep.subr.bf16.mxu0 0
      %845 = vmatpush1.bf16.msra.mxu0 0
      %846 = vmatprep.subr.bf16.mxu0 0
      %847 = vmatpush1.bf16.msra.mxu0 %v830
      %848 = vmatprep.subr.bf16.mxu0 0
      %849 = vmatpush2.bf16.msra.mxu0 0
      %850 = vmatprep.subr.bf16.mxu0 0
      %851 = vmatpush2.bf16.msra.mxu0 0
      %852 = vmatprep.subr.bf16.mxu0 0
      %853 = vmatpush2.bf16.msra.mxu0 0
      %854 = vmatprep.subr.bf16.mxu0 0
      %855 = vmatpush2.bf16.msra.mxu0 0
      %856 = vmatprep.subr.bf16.mxu0 0
      %857 = vmatpush2.bf16.msra.mxu0 0
      %858 = vmatprep.subr.bf16.mxu0 0
      %859 = vmatpush2.bf16.msra.mxu0 0
      %860 = vmatprep.subr.bf16.mxu0 0
      %861 = vmatpush2.bf16.msra.mxu0 0
      %862 = vmatprep.subr.bf16.mxu0 0
      %863 = vmatpush2.bf16.msra.mxu0 0
      %864 = vmatprep.mubr.bf16.mxu0 0
      %865 = vmatmul.mubr.bf16.gmra.mxu0 %v827
      %v866 = vpop.f32.mrf.mxu0
      %v867 = vadd.f32 0.0, %v866
      %v868 = vpop.f32.mrf.mxu0
      %v869 = vpop.f32.mrf.mxu0
      %v870 = vpop.f32.mrf.mxu0
      %871 = vdwg.mxu0
      %v872 = vadd.f32 %v822, %v867
      %873 = vst.msk [vmem:[%s815] sm:$0xff] %vm332, %v872
      %874 = vst.msk [vmem:[%s790] sm:$0xff] %vm401, %v795
      // Predicated region
      $region37: #{multi_head_attention.8} parent=31 // pred_check
        %p875 = pneg %p310
      $region38: #{multi_head_attention.8} parent=31 // pred_check_branch
        %877 = sbr.rel (%p875) target = $region40
      $region39: #{multi_head_attention.8} parent=31 // pred_region
        %v878 = vld [vmem:[#allocation3] sm:$0xff]
        %v879 = vrcp.pop %v878
        %v880 = vld [vmem:[#allocation4] sm:$0xff]
        %882 = vset.pattern.permute.xlu0 0
        %883 = vperm.xlu0 %882, %v879
        %v884 = vpop.permute.xlu0 %883
        %v886 = vmul.f32 %v880, %v884
        %v887 = vpack.c.bf16 %v886, %v886
        %vm888 = vcmask 60416
        %889 = vst.msk [vmem:[%s307] sm:$0xf] %vm888, %v887
        %v890 = vld [vmem:[%s534] sm:$0xff]
        %v891 = vrcp.pop %v890
        %v892 = vld [vmem:[%s542] sm:$0xff]
        %894 = vset.pattern.permute.xlu0 0
        %895 = vperm.xlu0 %894, %v891
        %v896 = vpop.permute.xlu0 %895
        %v898 = vmul.f32 %v892, %v896
        %v899 = vpack.c.bf16 %v898, %v898
        %v901 = vunpack.c.l.b16 %v899
        %v902 = vpack.c.b16 %v901, %v901
        %903 = vrot.lane.b32.xlu0 %v902, 8
        %v904 = vpop.permute.xlu0 %903
        %vm906 = vcmask 126016
        %907 = vst.msk [vmem:[%s307] sm:$0xf] %vm906, %v904
        %v908 = vld [vmem:[%s672] sm:$0xff]
        %v909 = vrcp.pop %v908
        %v910 = vld [vmem:[%s680] sm:$0xff]
        %912 = vset.pattern.permute.xlu0 0
        %913 = vperm.xlu0 %912, %v909
        %v914 = vpop.permute.xlu0 %913
        %v916 = vmul.f32 %v910, %v914
        %v917 = vpack.c.bf16 %v916, %v916
        %v919 = vunpack.c.l.b16 %v917
        %v920 = vpack.c.b16 %v919, %v919
        %921 = vrot.lane.b32.xlu0 %v920, 16
        %v922 = vpop.permute.xlu0 %921
        %vm924 = vcmask 191616
        %925 = vst.msk [vmem:[%s307] sm:$0xf] %vm924, %v922
        %v926 = vld [vmem:[%s807] sm:$0xff]
        %v927 = vrcp.pop %v926
        %v928 = vld [vmem:[%s815] sm:$0xff]
        %930 = vset.pattern.permute.xlu0 0
        %931 = vperm.xlu0 %930, %v927
        %v932 = vpop.permute.xlu0 %931
        %v934 = vmul.f32 %v928, %v932
        %v935 = vpack.c.bf16 %v934, %v934
        %v937 = vunpack.c.l.b16 %v935
        %v938 = vpack.c.b16 %v937, %v937
        %939 = vrot.lane.b32.xlu0 %v938, 24
        %v940 = vpop.permute.xlu0 %939
        %vm942 = vcmask 257216
        %943 = vst.msk [vmem:[%s307] sm:$0xf] %vm942, %v940
      $region40: #{multi_head_attention.8} parent=31 // pred_fallthru
        _
      %p944 = scmp.lt.s32.totalorder %s20, 1
      %s945 = scalar_select %p944, %s20, 1
      %p946 = scmp.lt.s32.totalorder %s22, 0
      %s947 = scalar_select %p946, %s22, 0
      %p948 = scmp.lt.s32.totalorder %s21, 0
      %s949 = scalar_select %p948, %s21, 0
      %s950 = sadd.s32 %s949, %s947
      %s951 = sadd.s32 %s950, %s945
      %s952 = smul.addr %s951, 4
      %s953 = scalar_lea.vmem %s3, %s952
      // Predicated region
      $region41: #{multi_head_attention.8} parent=31 // pred_check
        %p954 = pneg %p152
      $region42: #{multi_head_attention.8} parent=31 // pred_check_branch
        %956 = sbr.rel (%p954) target = $region44
      $region43: #{multi_head_attention.8} parent=31 // pred_region
        _
      $region44: #{multi_head_attention.8} parent=31 // pred_fallthru
        _
    $region32: #{multi_head_attention.8} parent=5 // pred_fallthru
      _
    %p957 = scmp.le.s32.totalorder 2, %s9
    // Predicated region
    $region45: #{multi_head_attention.8} parent=5 // pred_check
      %p958 = pneg %p957
    $region46: #{multi_head_attention.8} parent=5 // pred_check_branch
      %960 = sbr.rel (%p958) target = $region48
    $region47: #{multi_head_attention.8} parent=5 // pred_region
      %s961 = ssub.s32 %s9, 2
      // Predicated region
      $region49: #{multi_head_attention.8} parent=47 // pred_check
        %p962 = pneg %p158
      $region50: #{multi_head_attention.8} parent=47 // pred_check_branch
        %964 = sbr.rel (%p962) target = $region52
      $region51: #{multi_head_attention.8} parent=47 // pred_region
        %p965 = scmp.lt.s32.totalorder %s24, 1
        %s966 = scalar_select %p965, %s24, 1
        %p967 = scmp.lt.s32.totalorder %s26, 0
        %s968 = scalar_select %p967, %s26, 0
        %p969 = scmp.lt.s32.totalorder %s25, 0
        %s970 = scalar_select %p969, %s25, 0
        %s971 = sadd.s32 %s970, %s968
        %s972 = sadd.s32 %s971, %s966
        %s973 = smul.addr %s972, 4
        %s974 = scalar_lea.vmem %s3, %s973
      $region52: #{multi_head_attention.8} parent=47 // pred_fallthru
        _
    $region48: #{multi_head_attention.8} parent=5 // pred_fallthru
      _
  $region6: #{multi_head_attention.8} parent=0 // loop_footer
    %s13 = sadd.s32 1, %s9
  $region7: #{multi_head_attention.8} parent=0 // loop_footer_branch
    %8 = sbr.rel target = $region3
  $region8: #{multi_head_attention.8} parent=0 // loop_exit
    _

</llo_original>
